<compile_context>
chip_gen: v7x
topology: tpu7x:2x2x1
jax: 0.10.0
libtpu: 0.0.40
codegen_flags: <defaults>
</compile_context>

<pallas_src>
import functools

import jax
import jax.numpy as jnp
from jax.experimental import pallas as pl
from jax.experimental.pallas import tpu as pltpu


def _round_up(x, m):
    return (x + m - 1) // m * m


def _vmem_budget_bytes():
    """Generation-aware VMEM budget (v5e/v6e: 128 MiB physical, v7x: 64 MiB)."""
    cap = 32 * 1024 * 1024
    try:
        info = pltpu.get_tpu_info()
        cap = int(getattr(info, "vmem_capacity_bytes", cap) or cap)
    except Exception:
        pass
    return min(int(cap * 0.75), 100 * 1024 * 1024)


def _pass1_footprint(tm, tk, cp, y_bytes):
    return (2 * tm * tk * 2          # cols tile, double-buffered, bf16
            + 2 * tk * cp * 2        # weight tile, double-buffered, bf16
            + tm * cp * 4            # f32 accumulator scratch
            + 2 * tm * cp * y_bytes  # y writeback tile, double-buffered
            + 8 * cp * 4)            # gamma/beta/scale/shift blocks


def _choose_tiles(M, K, Cp, block_m, budget, y_bytes):
    """Largest (TM, TK) whose pass-1 footprint fits the budget."""
    K128 = _round_up(K, 128)
    tk_cands = sorted({c for c in (K128, 2048, 1024, 512, 256, 128) if c <= K128},
                      reverse=True)
    for tm_cand in (block_m, 512, 256, 128, 64, 32, 16):
        tm = _round_up(min(tm_cand, max(M, 1)), 16)
        for tk in tk_cands:
            if _pass1_footprint(tm, tk, Cp, y_bytes) <= budget:
                return tm, tk
    return 16, 128


# -------- pass 1: conv (im2col matmul, K-tiled) + per-channel stats ----------
def _conv_stats_kernel(cols_ref, w_ref, gamma_ref, beta_ref,
                       y_ref, scale_ref, shift_ref, acc_ref, *,
                       inv_count, eps):
    i = pl.program_id(0)          # M tile
    k = pl.program_id(1)          # K (reduction) tile
    nm = pl.num_programs(0)
    nk = pl.num_programs(1)

    @pl.when(jnp.logical_and(i == 0, k == 0))
    def _():
        # scale_ref / shift_ref double as the running per-channel sum / sumsq.
        scale_ref[...] = jnp.zeros_like(scale_ref)
        shift_ref[...] = jnp.zeros_like(shift_ref)

    @pl.when(k == 0)
    def _():
        acc_ref[...] = jnp.zeros_like(acc_ref)

    acc_ref[...] += jnp.dot(cols_ref[...], w_ref[...],
                            preferred_element_type=jnp.float32)

    @pl.when(k == nk - 1)
    def _():
        y = acc_ref[...]                      # f32: stats taken before bf16 cast
        y_ref[...] = y.astype(y_ref.dtype)
        scale_ref[...] += jnp.sum(y, axis=0, keepdims=True)
        shift_ref[...] += jnp.sum(y * y, axis=0, keepdims=True)

    @pl.when(jnp.logical_and(i == nm - 1, k == nk - 1))
    def _():
        # Finalize: overwrite the running sums with BN scale / shift.
        mean = scale_ref[...] * inv_count
        var = jnp.maximum(shift_ref[...] * inv_count - mean * mean, 0.0)
        scale = jax.lax.rsqrt(var + eps) * gamma_ref[...]
        shift = beta_ref[...] - mean * scale
        scale_ref[...] = scale
        shift_ref[...] = shift


# -------- pass 2: y * scale + shift (+ ReLU), memory-bound, large tiles ------
def _bn_relu_kernel(y_ref, scale_ref, shift_ref, out_ref, *, use_relu):
    y = y_ref[...].astype(jnp.float32) * scale_ref[...] + shift_ref[...]
    if use_relu:
        y = jnp.maximum(y, 0.0)
    out_ref[...] = y.astype(out_ref.dtype)


# -------- single pass when bn=False: conv (K-tiled) + optional ReLU ----------
def _conv_kernel(cols_ref, w_ref, out_ref, acc_ref, *, use_relu):
    k = pl.program_id(1)

    @pl.when(k == 0)
    def _():
        acc_ref[...] = jnp.zeros_like(acc_ref)

    acc_ref[...] += jnp.dot(cols_ref[...], w_ref[...],
                            preferred_element_type=jnp.float32)

    @pl.when(k == pl.num_programs(1) - 1)
    def _():
        y = acc_ref[...]
        if use_relu:
            y = jnp.maximum(y, 0.0)
        out_ref[...] = y.astype(out_ref.dtype)


def basic_conv(x_nchw, weight, gamma=None, beta=None, *, stride=1, padding=0,
               dilation=1, groups=1, relu=True, bn=True, eps=1e-5,
               block_m=512, block_m_pass2=2048):
    """Forward pass equivalent of BasicConv (bias=False)."""
    assert groups == 1  # TODO(synk): grouped convolution not implemented
    N, Cin, H, W = x_nchw.shape
    Cout, Cin_w, KH, KW = weight.shape
    assert Cin_w == Cin
    OH = (H + 2 * padding - dilation * (KH - 1) - 1) // stride + 1
    OW = (W + 2 * padding - dilation * (KW - 1) - 1) // stride + 1
    out_dtype = x_nchw.dtype

    # ---- glue: NCHW -> NHWC, spatial pad, im2col patch extraction (bf16) ----
    # TODO(synk): im2col materializes KH*KW x the input bytes in HBM; a direct
    # per-tap accumulating conv would remove this inflation for 3x3 kernels.
    x = jnp.transpose(x_nchw, (0, 2, 3, 1)).astype(jnp.bfloat16)
    x = jnp.pad(x, ((0, 0), (padding, padding), (padding, padding), (0, 0)))
    patches = []
    for kh in range(KH):
        for kw in range(KW):
            h0 = kh * dilation
            w0 = kw * dilation
            patches.append(
                x[:, h0:h0 + (OH - 1) * stride + 1:stride,
                     w0:w0 + (OW - 1) * stride + 1:stride, :])
    cols = jnp.concatenate(patches, axis=-1).reshape(N * OH * OW, KH * KW * Cin)
    M, K = cols.shape

    # ---- lane-dense channel / contraction axes -------------------------------
    # TODO(synk): for Cout >= 256 on v6e/v7x an extra output-channel grid axis
    # (256-wide N tiles) would fill the 256x256 MXU better; single Cp block here.
    Cp = _round_up(Cout, 128)
    y_mid_dtype = jnp.bfloat16
    budget = _vmem_budget_bytes()
    TM, TK = _choose_tiles(M, K, Cp, block_m, budget // 2,
                           jnp.dtype(y_mid_dtype).itemsize)

    K_pad = _round_up(K, TK)
    M_pad = _round_up(M, TM)
    if K_pad != K or M_pad != M:
        cols = jnp.pad(cols, ((0, M_pad - M), (0, K_pad - K)))
    n_m = M_pad // TM
    n_k = K_pad // TK

    w2d = jnp.transpose(weight, (2, 3, 1, 0)).reshape(K, Cout).astype(jnp.bfloat16)
    w2d = jnp.pad(w2d, ((0, K_pad - K), (0, Cp - Cout)))

    if not bn:
        kernel = functools.partial(_conv_kernel, use_relu=relu)
        out2d = pl.pallas_call(
            kernel,
            out_shape=jax.ShapeDtypeStruct((M_pad, Cp), out_dtype),
            grid=(n_m, n_k),
            in_specs=[
                pl.BlockSpec((TM, TK), lambda i, k: (i, k)),
                pl.BlockSpec((TK, Cp), lambda i, k: (k, 0)),
            ],
            out_specs=pl.BlockSpec((TM, Cp), lambda i, k: (i, 0)),
            scratch_shapes=[pltpu.VMEM((TM, Cp), jnp.float32)],
            compiler_params=pltpu.CompilerParams(
                dimension_semantics=("parallel", "arbitrary"),
                vmem_limit_bytes=budget),
        )(cols, w2d)
    else:
        assert gamma is not None and beta is not None
        gamma_p = jnp.pad(gamma.reshape(1, Cout).astype(jnp.float32),
                          ((0, 0), (0, Cp - Cout)))
        beta_p = jnp.pad(beta.reshape(1, Cout).astype(jnp.float32),
                         ((0, 0), (0, Cp - Cout)))

        # pass 1: K-tiled matmul, bf16 y writeback, BN scale/shift finalized
        # in the last-step epilogue.  The M axis carries the stats reduction,
        # so both grid axes are "arbitrary".
        # TODO(synk): on v7x (2 TCs) pass 1 could add a leading per-core axis
        # with per-core partial sums reduced before pass 2.
        kernel1 = functools.partial(_conv_stats_kernel, inv_count=1.0 / M,
                                    eps=eps)
        y2d, scale, shift = pl.pallas_call(
            kernel1,
            out_shape=(
                jax.ShapeDtypeStruct((M_pad, Cp), y_mid_dtype),
                jax.ShapeDtypeStruct((1, Cp), jnp.float32),
                jax.ShapeDtypeStruct((1, Cp), jnp.float32),
            ),
            grid=(n_m, n_k),
            in_specs=[
                pl.BlockSpec((TM, TK), lambda i, k: (i, k)),
                pl.BlockSpec((TK, Cp), lambda i, k: (k, 0)),
                pl.BlockSpec((1, Cp), lambda i, k: (0, 0)),
                pl.BlockSpec((1, Cp), lambda i, k: (0, 0)),
            ],
            out_specs=(
                pl.BlockSpec((TM, Cp), lambda i, k: (i, 0)),
                pl.BlockSpec((1, Cp), lambda i, k: (0, 0)),
                pl.BlockSpec((1, Cp), lambda i, k: (0, 0)),
            ),
            scratch_shapes=[pltpu.VMEM((TM, Cp), jnp.float32)],
            compiler_params=pltpu.CompilerParams(
                dimension_semantics=("arbitrary", "arbitrary"),
                vmem_limit_bytes=budget),
        )(cols, w2d, gamma_p, beta_p)

        # pass 2 tile: as many pass-1 tiles as fit in block_m_pass2 rows and
        # half the VMEM budget (pass 2 has no K term, so it can be much wider).
        out_bytes = jnp.dtype(out_dtype).itemsize
        mid_bytes = jnp.dtype(y_mid_dtype).itemsize

        def _p2_fp(tm2):
            return 2 * tm2 * Cp * mid_bytes + 2 * tm2 * Cp * out_bytes + 8 * Cp * 4

        d = 1
        for c in range(1, n_m + 1):
            if (n_m % c == 0 and TM * c <= max(block_m_pass2, TM)
                    and _p2_fp(TM * c) <= budget // 2):
                d = c
        TM2 = TM * d
        n_m2 = n_m // d

        io_alias = ({0: 0} if jnp.dtype(y_mid_dtype) == jnp.dtype(out_dtype)
                    else {})
        kernel2 = functools.partial(_bn_relu_kernel, use_relu=relu)
        out2d = pl.pallas_call(
            kernel2,
            out_shape=jax.ShapeDtypeStruct((M_pad, Cp), out_dtype),
            grid=(n_m2,),
            in_specs=[
                pl.BlockSpec((TM2, Cp), lambda i: (i, 0)),
                pl.BlockSpec((1, Cp), lambda i: (0, 0)),
                pl.BlockSpec((1, Cp), lambda i: (0, 0)),
            ],
            out_specs=pl.BlockSpec((TM2, Cp), lambda i: (i, 0)),
            compiler_params=pltpu.CompilerParams(
                dimension_semantics=("parallel",),
                vmem_limit_bytes=budget),
            input_output_aliases=io_alias,
        )(y2d, scale, shift)

    # TODO(synk): running_mean/running_var momentum buffers are not updated
    # (they do not affect the train-mode forward output).
    y = out2d[:M, :Cout].reshape(N, OH, OW, Cout)
    return jnp.transpose(y, (0, 3, 1, 2))


def _reference(x, weight, gamma, beta, *, stride, padding, dilation, eps=1e-5):
    y = jax.lax.conv_general_dilated(
        x, weight, window_strides=(stride, stride),
        padding=[(padding, padding), (padding, padding)],
        rhs_dilation=(dilation, dilation),
        dimension_numbers=('NCHW', 'OIHW', 'NCHW'),
        precision=jax.lax.Precision.HIGHEST)
    mean = y.mean(axis=(0, 2, 3), keepdims=True)
    var = ((y - mean) ** 2).mean(axis=(0, 2, 3), keepdims=True)
    y = (y - mean) * jax.lax.rsqrt(var + eps)
    y = y * gamma.reshape(1, -1, 1, 1) + beta.reshape(1, -1, 1, 1)
    return jnp.maximum(y, 0.0)


if __name__ == "__main__":
    # BasicConv(in_planes=4, out_planes=8, kernel_size=3, stride=1, padding=1)
    N, Cin, H, W = 2, 4, 16, 16
    Cout, KH, KW = 8, 3, 3
    stride, padding, dilation = 1, 1, 1

    key = jax.random.PRNGKey(0)
    kx, kw = jax.random.split(key)
    x = jax.random.normal(kx, (N, Cin, H, W), dtype=jnp.float32)
    weight = jax.random.normal(kw, (Cout, Cin, KH, KW), dtype=jnp.float32) * 0.1
    gamma = jnp.ones((Cout,), dtype=jnp.float32)   # BatchNorm2d default init
    beta = jnp.zeros((Cout,), dtype=jnp.float32)

    y = basic_conv(x, weight, gamma, beta, stride=stride, padding=padding,
                   dilation=dilation, relu=True, bn=True)
    y = jax.block_until_ready(y)

    y_ref = _reference(x, weight, gamma, beta, stride=stride, padding=padding,
                       dilation=dilation)
    assert y.shape == (N, Cout, H, W)
    # Tolerance accounts for bf16 MXU inputs / bf16 intermediate vs f32-HIGHEST
    # reference; normalized outputs are O(1) so 2e-2 is comfortably above the
    # expected rounding error.
    assert jnp.allclose(y, y_ref, rtol=2e-2, atol=2e-2)

    print("KERNEL_OK")
</pallas_src>

<mosaic_0001>
module attributes {stable_mosaic.version = 11 : i64} {
  func.func @_conv_stats_kernel(%arg0: i32, %arg1: i32, %arg2: memref<512x128xbf16, #tpu.memory_space<vmem>>, %arg3: memref<128x128xbf16, #tpu.memory_space<vmem>>, %arg4: memref<1x128xf32, #tpu.memory_space<vmem>>, %arg5: memref<1x128xf32, #tpu.memory_space<vmem>>, %arg6: memref<512x128xbf16, #tpu.memory_space<vmem>>, %arg7: memref<1x128xf32, #tpu.memory_space<vmem>>, %arg8: memref<1x128xf32, #tpu.memory_space<vmem>>, %arg9: memref<512x128xf32, #tpu.memory_space<vmem>>) attributes {dimension_semantics = [#tpu.dimension_semantics<arbitrary>, #tpu.dimension_semantics<arbitrary>], iteration_bounds = array<i64: 1, 1>, scalar_prefetch = 0 : i64, scratch_operands = 1 : i64, tpu.core_type = #tpu.core_type<tc>, window_params = [{transform_indices = @transform_0, window_bounds = array<i64: 512, 128>}, {transform_indices = @transform_1, window_bounds = array<i64: 128, 128>}, {pipeline_mode = #tpu.pipeline_mode<synchronous>, transform_indices = @transform_2, window_bounds = array<i64: 1, 128>}, {pipeline_mode = #tpu.pipeline_mode<synchronous>, transform_indices = @transform_3, window_bounds = array<i64: 1, 128>}, {transform_indices = @transform_4, window_bounds = array<i64: 512, 128>}, {pipeline_mode = #tpu.pipeline_mode<synchronous>, transform_indices = @transform_5, window_bounds = array<i64: 1, 128>}, {pipeline_mode = #tpu.pipeline_mode<synchronous>, transform_indices = @transform_6, window_bounds = array<i64: 1, 128>}]} {
    %c0_i32 = arith.constant 0 : i32
    %0 = arith.cmpi eq, %arg0, %c0_i32 : i32
    %c0_i32_0 = arith.constant 0 : i32
    %1 = arith.cmpi eq, %arg1, %c0_i32_0 : i32
    %2 = arith.andi %0, %1 : i1
    %3 = arith.extui %2 : i1 to i32
    %c0_i32_1 = arith.constant 0 : i32
    %4 = arith.cmpi ne, %3, %c0_i32_1 : i32
    scf.if %4 {
      %cst_16 = arith.constant 0.000000e+00 : f32
      %22 = vector.broadcast %cst_16 : f32 to vector<1x128xf32>
      %c0_17 = arith.constant 0 : index
      %c0_18 = arith.constant 0 : index
      %23 = vector.load %arg7[%c0_17, %c0_18] : memref<1x128xf32, #tpu.memory_space<vmem>>, vector<1x128xf32>
      tpu.vector_store %arg7[%c0_17, %c0_18], %22 {strides = array<i32>} : memref<1x128xf32, #tpu.memory_space<vmem>>, vector<1x128xf32>,
      %cst_19 = arith.constant 0.000000e+00 : f32
      %24 = vector.broadcast %cst_19 : f32 to vector<1x128xf32>
      %c0_20 = arith.constant 0 : index
      %c0_21 = arith.constant 0 : index
      %25 = vector.load %arg8[%c0_20, %c0_21] : memref<1x128xf32, #tpu.memory_space<vmem>>, vector<1x128xf32>
      tpu.vector_store %arg8[%c0_20, %c0_21], %24 {strides = array<i32>} : memref<1x128xf32, #tpu.memory_space<vmem>>, vector<1x128xf32>,
    } else {
    }
    %c0_i32_2 = arith.constant 0 : i32
    %5 = arith.cmpi eq, %arg1, %c0_i32_2 : i32
    %6 = arith.extui %5 : i1 to i32
    %c0_i32_3 = arith.constant 0 : i32
    %7 = arith.cmpi ne, %6, %c0_i32_3 : i32
    scf.if %7 {
      %cst_16 = arith.constant 0.000000e+00 : f32
      %22 = vector.broadcast %cst_16 : f32 to vector<512x128xf32>
      %c0_17 = arith.constant 0 : index
      %c0_18 = arith.constant 0 : index
      %23 = vector.load %arg9[%c0_17, %c0_18] : memref<512x128xf32, #tpu.memory_space<vmem>>, vector<512x128xf32>
      tpu.vector_store %arg9[%c0_17, %c0_18], %22 {strides = array<i32>} : memref<512x128xf32, #tpu.memory_space<vmem>>, vector<512x128xf32>,
    } else {
    }
    %c0 = arith.constant 0 : index
    %c0_4 = arith.constant 0 : index
    %8 = vector.load %arg9[%c0, %c0_4] : memref<512x128xf32, #tpu.memory_space<vmem>>, vector<512x128xf32>
    %c0_5 = arith.constant 0 : index
    %c0_6 = arith.constant 0 : index
    %9 = vector.load %arg2[%c0_5, %c0_6] : memref<512x128xbf16, #tpu.memory_space<vmem>>, vector<512x128xbf16>
    %c0_7 = arith.constant 0 : index
    %c0_8 = arith.constant 0 : index
    %10 = vector.load %arg3[%c0_7, %c0_8] : memref<128x128xbf16, #tpu.memory_space<vmem>>, vector<128x128xbf16>
    %cst = arith.constant dense<0.000000e+00> : vector<512x128xf32>
    %11 = tpu.matmul %9, %10, %cst {dimension_numbers = #tpu.dot_dimension_numbers<[1], [0], [0], [1], [0, 0, 1, 1], [], []>} : vector<512x128xbf16>, vector<128x128xbf16>, vector<512x128xf32> -> vector<512x128xf32>
    %12 = arith.addf %8, %11 : vector<512x128xf32>
    %c0_9 = arith.constant 0 : index
    %c0_10 = arith.constant 0 : index
    %13 = vector.load %arg9[%c0_9, %c0_10] : memref<512x128xf32, #tpu.memory_space<vmem>>, vector<512x128xf32>
    tpu.vector_store %arg9[%c0_9, %c0_10], %12 {strides = array<i32>} : memref<512x128xf32, #tpu.memory_space<vmem>>, vector<512x128xf32>,
    %c0_i32_11 = arith.constant 0 : i32
    %14 = arith.cmpi eq, %arg1, %c0_i32_11 : i32
    %15 = arith.extui %14 : i1 to i32
    %c0_i32_12 = arith.constant 0 : i32
    %16 = arith.cmpi ne, %15, %c0_i32_12 : i32
    scf.if %16 {
      %c0_16 = arith.constant 0 : index
      %c0_17 = arith.constant 0 : index
      %22 = vector.load %arg9[%c0_16, %c0_17] : memref<512x128xf32, #tpu.memory_space<vmem>>, vector<512x128xf32>
      %23 = arith.truncf %22 : vector<512x128xf32> to vector<512x128xbf16>
      %c0_18 = arith.constant 0 : index
      %c0_19 = arith.constant 0 : index
      %24 = vector.load %arg6[%c0_18, %c0_19] : memref<512x128xbf16, #tpu.memory_space<vmem>>, vector<512x128xbf16>
      tpu.vector_store %arg6[%c0_18, %c0_19], %23 {strides = array<i32>} : memref<512x128xbf16, #tpu.memory_space<vmem>>, vector<512x128xbf16>,
      %c0_20 = arith.constant 0 : index
      %c0_21 = arith.constant 0 : index
      %25 = vector.load %arg7[%c0_20, %c0_21] : memref<1x128xf32, #tpu.memory_space<vmem>>, vector<1x128xf32>
      %cst_22 = arith.constant dense<0.000000e+00> : vector<128xf32>
      %26 = vector.multi_reduction <add>, %22, %cst_22 [0] : vector<512x128xf32> to vector<128xf32>
      %27 = vector.shape_cast %26 : vector<128xf32> to vector<1x128xf32>
      %28 = arith.addf %25, %27 : vector<1x128xf32>
      %c0_23 = arith.constant 0 : index
      %c0_24 = arith.constant 0 : index
      %29 = vector.load %arg7[%c0_23, %c0_24] : memref<1x128xf32, #tpu.memory_space<vmem>>, vector<1x128xf32>
      tpu.vector_store %arg7[%c0_23, %c0_24], %28 {strides = array<i32>} : memref<1x128xf32, #tpu.memory_space<vmem>>, vector<1x128xf32>,
      %c0_25 = arith.constant 0 : index
      %c0_26 = arith.constant 0 : index
      %30 = vector.load %arg8[%c0_25, %c0_26] : memref<1x128xf32, #tpu.memory_space<vmem>>, vector<1x128xf32>
      %31 = arith.mulf %22, %22 : vector<512x128xf32>
      %cst_27 = arith.constant dense<0.000000e+00> : vector<128xf32>
      %32 = vector.multi_reduction <add>, %31, %cst_27 [0] : vector<512x128xf32> to vector<128xf32>
      %33 = vector.shape_cast %32 : vector<128xf32> to vector<1x128xf32>
      %34 = arith.addf %30, %33 : vector<1x128xf32>
      %c0_28 = arith.constant 0 : index
      %c0_29 = arith.constant 0 : index
      %35 = vector.load %arg8[%c0_28, %c0_29] : memref<1x128xf32, #tpu.memory_space<vmem>>, vector<1x128xf32>
      tpu.vector_store %arg8[%c0_28, %c0_29], %34 {strides = array<i32>} : memref<1x128xf32, #tpu.memory_space<vmem>>, vector<1x128xf32>,
    } else {
    }
    %c0_i32_13 = arith.constant 0 : i32
    %17 = arith.cmpi eq, %arg0, %c0_i32_13 : i32
    %c0_i32_14 = arith.constant 0 : i32
    %18 = arith.cmpi eq, %arg1, %c0_i32_14 : i32
    %19 = arith.andi %17, %18 : i1
    %20 = arith.extui %19 : i1 to i32
    %c0_i32_15 = arith.constant 0 : i32
    %21 = arith.cmpi ne, %20, %c0_i32_15 : i32
    scf.if %21 {
      %c0_16 = arith.constant 0 : index
      %c0_17 = arith.constant 0 : index
      %22 = vector.load %arg7[%c0_16, %c0_17] : memref<1x128xf32, #tpu.memory_space<vmem>>, vector<1x128xf32>
      %cst_18 = arith.constant 0.001953125 : f32
      %23 = vector.broadcast %cst_18 : f32 to vector<1x128xf32>
      %24 = arith.mulf %22, %23 : vector<1x128xf32>
      %c0_19 = arith.constant 0 : index
      %c0_20 = arith.constant 0 : index
      %25 = vector.load %arg8[%c0_19, %c0_20] : memref<1x128xf32, #tpu.memory_space<vmem>>, vector<1x128xf32>
      %cst_21 = arith.constant 0.001953125 : f32
      %26 = vector.broadcast %cst_21 : f32 to vector<1x128xf32>
      %27 = arith.mulf %25, %26 : vector<1x128xf32>
      %28 = arith.mulf %24, %24 : vector<1x128xf32>
      %29 = arith.subf %27, %28 : vector<1x128xf32>
      %cst_22 = arith.constant 0.000000e+00 : f32
      %30 = vector.broadcast %cst_22 : f32 to vector<1x128xf32>
      %31 = arith.maximumf %29, %30 : vector<1x128xf32>
      %cst_23 = arith.constant 9.99999974E-6 : f32
      %32 = vector.broadcast %cst_23 : f32 to vector<1x128xf32>
      %33 = arith.addf %31, %32 : vector<1x128xf32>
      %34 = math.rsqrt %33 : vector<1x128xf32>
      %c0_24 = arith.constant 0 : index
      %c0_25 = arith.constant 0 : index
      %35 = vector.load %arg4[%c0_24, %c0_25] : memref<1x128xf32, #tpu.memory_space<vmem>>, vector<1x128xf32>
      %36 = arith.mulf %34, %35 : vector<1x128xf32>
      %c0_26 = arith.constant 0 : index
      %c0_27 = arith.constant 0 : index
      %37 = vector.load %arg5[%c0_26, %c0_27] : memref<1x128xf32, #tpu.memory_space<vmem>>, vector<1x128xf32>
      %38 = arith.mulf %24, %36 : vector<1x128xf32>
      %39 = arith.subf %37, %38 : vector<1x128xf32>
      %c0_28 = arith.constant 0 : index
      %c0_29 = arith.constant 0 : index
      %40 = vector.load %arg7[%c0_28, %c0_29] : memref<1x128xf32, #tpu.memory_space<vmem>>, vector<1x128xf32>
      tpu.vector_store %arg7[%c0_28, %c0_29], %36 {strides = array<i32>} : memref<1x128xf32, #tpu.memory_space<vmem>>, vector<1x128xf32>,
      %c0_30 = arith.constant 0 : index
      %c0_31 = arith.constant 0 : index
      %41 = vector.load %arg8[%c0_30, %c0_31] : memref<1x128xf32, #tpu.memory_space<vmem>>, vector<1x128xf32>
      tpu.vector_store %arg8[%c0_30, %c0_31], %39 {strides = array<i32>} : memref<1x128xf32, #tpu.memory_space<vmem>>, vector<1x128xf32>,
    } else {
    }
    return
  }
  func.func @transform_0(%arg0: i32, %arg1: i32) -> (i32, i32) {
    %c0_i32 = arith.constant 0 : i32
    return %arg0, %arg1 : i32, i32
  }
  func.func @transform_1(%arg0: i32, %arg1: i32) -> (i32, i32) {
    %c0_i32 = arith.constant 0 : i32
    %c0_i32_0 = arith.constant 0 : i32
    return %arg1, %c0_i32 : i32, i32
  }
  func.func @transform_2(%arg0: i32, %arg1: i32) -> (i32, i32) {
    %c0_i32 = arith.constant 0 : i32
    %c0_i32_0 = arith.constant 0 : i32
    %c0_i32_1 = arith.constant 0 : i32
    return %c0_i32, %c0_i32_0 : i32, i32
  }
  func.func @transform_3(%arg0: i32, %arg1: i32) -> (i32, i32) {
    %c0_i32 = arith.constant 0 : i32
    %c0_i32_0 = arith.constant 0 : i32
    %c0_i32_1 = arith.constant 0 : i32
    return %c0_i32, %c0_i32_0 : i32, i32
  }
  func.func @transform_4(%arg0: i32, %arg1: i32) -> (i32, i32) {
    %c0_i32 = arith.constant 0 : i32
    %c0_i32_0 = arith.constant 0 : i32
    return %arg0, %c0_i32 : i32, i32
  }
  func.func @transform_5(%arg0: i32, %arg1: i32) -> (i32, i32) {
    %c0_i32 = arith.constant 0 : i32
    %c0_i32_0 = arith.constant 0 : i32
    %c0_i32_1 = arith.constant 0 : i32
    return %c0_i32, %c0_i32_0 : i32, i32
  }
  func.func @transform_6(%arg0: i32, %arg1: i32) -> (i32, i32) {
    %c0_i32 = arith.constant 0 : i32
    %c0_i32_0 = arith.constant 0 : i32
    %c0_i32_1 = arith.constant 0 : i32
    return %c0_i32, %c0_i32_0 : i32, i32
  }
}

</mosaic_0001>

<llo_original>
// kernel: tpu_custom_call.1
$region0: #{tpu_custom_call.1}
  #allocation0 [shape = 'u32[]', space=smem, size = 0x4, offset = 0x4, fixed_abs, tag = 'smem constant byte address 0x4 - core index']
  #allocation1 [shape = 'u32[144,128]{1,0:T(1,128)}', space=vmem, size = 0x12000, scoped, tag = 'internal scratch']
  #allocation2 [shape = 'f32[512,128]{1,0:T(8,128)}', space=vmem, size = 0x40000, scoped, tag = 'scratch operand']
  %s0 = inlined_call_operand.hbm [shape: bf16[512,128], index: 0, kind: input, shape index: {}]
  %s1 = inlined_call_operand.hbm [shape: bf16[128,128], index: 1, kind: input, shape index: {}]
  %s2 = inlined_call_operand.vmem [shape: f32[1,128], index: 2, kind: input, shape index: {}]
  %s3 = inlined_call_operand.vmem [shape: f32[1,128], index: 3, kind: input, shape index: {}]
  %s4 = inlined_call_operand.hbm [shape: bf16[512,128], index: 4, kind: output, shape index: {0}]
  %s5 = inlined_call_operand.hbm [shape: f32[1,128], index: 5, kind: output, shape index: {1}]
  %s6 = inlined_call_operand.hbm [shape: f32[1,128], index: 6, kind: output, shape index: {2}]
  %7 = xla_tuple %s4, %s5, %s6
  %s8 = sld [smem:[#allocation0]]
  $region66: #{tpu_custom_call.1} parent=0
    _
  %s10 = ssub.s32 1, %s8
  %s11 = scalar_select 0, %s10, %s8
  $region1: #{tpu_custom_call.1} parent=0
    #allocation3 [shape = 'u8[131072]{0}', space=vmem, size = 0x20000, scoped, tag = 'input window, operand 0, single buffered']
    #allocation4 [shape = 's32[1]{0}', space=sflag, size = 0x4, scoped, tag = 'scoped memory for tpu_custom_call.1']
    #allocation5 [shape = 's32[1]{0}', space=sflag, size = 0x4, scoped, tag = 'scoped memory for tpu_custom_call.1']
    #allocation6 [shape = 'u8[32768]{0}', space=vmem, size = 0x8000, scoped, tag = 'input window, operand 1, single buffered']
    #allocation7 [shape = 's32[1]{0}', space=sflag, size = 0x4, scoped, tag = 'scoped memory for tpu_custom_call.1']
    #allocation8 [shape = 'u8[131072]{0}', space=vmem, size = 0x20000, scoped, tag = 'output window, operand 0, single buffered']
    #allocation9 [shape = 'u8[512]{0}', space=vmem, size = 0x400, scoped, tag = 'output window, operand 1, single buffered']
    #allocation10 [shape = 's32[1]{0}', space=sflag, size = 0x4, scoped, tag = 'scoped memory for tpu_custom_call.1']
    #allocation11 [shape = 'u8[512]{0}', space=vmem, size = 0x400, scoped, tag = 'output window, operand 2, single buffered']
    %12 = vsyncpa [#allocation4], 0
    %13 = vsyncpa [#allocation7], 0
    %14 = vsyncpa [#allocation5], 0
    %15 = vsyncpa [#allocation10], 0
    // Predicated region
    $region2: #{tpu_custom_call.1} parent=1 // pred_check
      _
    $region3: #{tpu_custom_call.1} parent=1 // pred_check_branch
      %17 = sbr.rel (0) target = $region5
    $region4: #{tpu_custom_call.1} parent=1 // pred_region
      %s19 = ssub.s32 4096, 4096
      %20 = vsyncadd [#allocation4], %s19
      %s21 = sshll.u32 [#allocation3], 4
      %s22 = int_to_ptr.vmem [resolvable:$true] %s21
      %27 = dma.hbm_to_vmem [thread:$0]  %s0, 4096, %s22, [#allocation4], 64, 64, 4
    $region5: #{tpu_custom_call.1} parent=1 // pred_fallthru
      _
    // Predicated region
    $region6: #{tpu_custom_call.1} parent=1 // pred_check
      _
    $region7: #{tpu_custom_call.1} parent=1 // pred_check_branch
      %29 = sbr.rel (0) target = $region9
    $region8: #{tpu_custom_call.1} parent=1 // pred_region
      %s31 = ssub.s32 1024, 1024
      %32 = vsyncadd [#allocation7], %s31
      %s33 = sshll.u32 [#allocation6], 4
      %s34 = int_to_ptr.vmem [resolvable:$true] %s33
      %39 = dma.hbm_to_vmem [thread:$0]  %s1, 1024, %s34, [#allocation7], 64, 64, 4
    $region9: #{tpu_custom_call.1} parent=1 // pred_fallthru
      _
    // Predicated region
    $region10: #{tpu_custom_call.1} parent=1 // pred_check
      _
    $region11: #{tpu_custom_call.1} parent=1 // pred_check_branch
      %41 = sbr.rel (0) target = $region13
    $region12: #{tpu_custom_call.1} parent=1 // pred_region
      _
    $region13: #{tpu_custom_call.1} parent=1 // pred_fallthru
      _
    // Predicated region
    $region14: #{tpu_custom_call.1} parent=1 // pred_check
      _
    $region15: #{tpu_custom_call.1} parent=1 // pred_check_branch
      %43 = sbr.rel (0) target = $region17
    $region16: #{tpu_custom_call.1} parent=1 // pred_region
      _
    $region17: #{tpu_custom_call.1} parent=1 // pred_fallthru
      _
    // Predicated region
    $region18: #{tpu_custom_call.1} parent=1 // pred_check
      _
    $region19: #{tpu_custom_call.1} parent=1 // pred_check_branch
      %45 = sbr.rel (0) target = $region21
    $region20: #{tpu_custom_call.1} parent=1 // pred_region
      %46 = dma.done [#allocation4], 4096
    $region21: #{tpu_custom_call.1} parent=1 // pred_fallthru
      _
    // Predicated region
    $region22: #{tpu_custom_call.1} parent=1 // pred_check
      _
    $region23: #{tpu_custom_call.1} parent=1 // pred_check_branch
      %48 = sbr.rel (0) target = $region25
    $region24: #{tpu_custom_call.1} parent=1 // pred_region
      %49 = dma.done [#allocation7], 1024
    $region25: #{tpu_custom_call.1} parent=1 // pred_fallthru
      _
    %p51 = scmp.eq.s32.totalorder 0, 0
    %p52 = scmp.eq.s32.totalorder 0, 0
    %p53 = pnand %p51, %p52
    %p54 = pneg %p53
    // Predicated region
    $region26: #{tpu_custom_call.1} parent=1 // pred_check
      _
    $region27: #{tpu_custom_call.1} parent=1 // pred_check_branch
      %56 = sbr.rel (%p53) target = $region29
    $region28: #{tpu_custom_call.1} parent=1 // pred_region
      %57 = vst [vmem:[#allocation9] sm:$0x1] 0.0
      %58 = vst [vmem:[#allocation11] sm:$0x1] 0.0
    $region29: #{tpu_custom_call.1} parent=1 // pred_fallthru
      _
    // Predicated region
    $region30: #{tpu_custom_call.1} parent=1 // pred_check
      %p59 = pneg %p52
    $region31: #{tpu_custom_call.1} parent=1 // pred_check_branch
      %61 = sbr.rel (%p59) target = $region33
    $region32: #{tpu_custom_call.1} parent=1 // pred_region
      %62 = vst [vmem:[#allocation2] sm:$0xff] 0.0
      %63 = vst [vmem:[#allocation2 + $0x8] sm:$0xff] 0.0
      %64 = vst [vmem:[#allocation2 + $0x10] sm:$0xff] 0.0
      %65 = vst [vmem:[#allocation2 + $0x18] sm:$0xff] 0.0
      %66 = vst [vmem:[#allocation2 + $0x20] sm:$0xff] 0.0
      %67 = vst [vmem:[#allocation2 + $0x28] sm:$0xff] 0.0
      %68 = vst [vmem:[#allocation2 + $0x30] sm:$0xff] 0.0
      %69 = vst [vmem:[#allocation2 + $0x38] sm:$0xff] 0.0
      %70 = vst [vmem:[#allocation2 + $0x40] sm:$0xff] 0.0
      %71 = vst [vmem:[#allocation2 + $0x48] sm:$0xff] 0.0
      %72 = vst [vmem:[#allocation2 + $0x50] sm:$0xff] 0.0
      %73 = vst [vmem:[#allocation2 + $0x58] sm:$0xff] 0.0
      %74 = vst [vmem:[#allocation2 + $0x60] sm:$0xff] 0.0
      %75 = vst [vmem:[#allocation2 + $0x68] sm:$0xff] 0.0
      %76 = vst [vmem:[#allocation2 + $0x70] sm:$0xff] 0.0
      %77 = vst [vmem:[#allocation2 + $0x78] sm:$0xff] 0.0
      %78 = vst [vmem:[#allocation2 + $0x80] sm:$0xff] 0.0
      %79 = vst [vmem:[#allocation2 + $0x88] sm:$0xff] 0.0
      %80 = vst [vmem:[#allocation2 + $0x90] sm:$0xff] 0.0
      %81 = vst [vmem:[#allocation2 + $0x98] sm:$0xff] 0.0
      %82 = vst [vmem:[#allocation2 + $0xa0] sm:$0xff] 0.0
      %83 = vst [vmem:[#allocation2 + $0xa8] sm:$0xff] 0.0
      %84 = vst [vmem:[#allocation2 + $0xb0] sm:$0xff] 0.0
      %85 = vst [vmem:[#allocation2 + $0xb8] sm:$0xff] 0.0
      %86 = vst [vmem:[#allocation2 + $0xc0] sm:$0xff] 0.0
      %87 = vst [vmem:[#allocation2 + $0xc8] sm:$0xff] 0.0
      %88 = vst [vmem:[#allocation2 + $0xd0] sm:$0xff] 0.0
      %89 = vst [vmem:[#allocation2 + $0xd8] sm:$0xff] 0.0
      %90 = vst [vmem:[#allocation2 + $0xe0] sm:$0xff] 0.0
      %91 = vst [vmem:[#allocation2 + $0xe8] sm:$0xff] 0.0
      %92 = vst [vmem:[#allocation2 + $0xf0] sm:$0xff] 0.0
      %93 = vst [vmem:[#allocation2 + $0xf8] sm:$0xff] 0.0
      %94 = vst [vmem:[#allocation2 + $0x100] sm:$0xff] 0.0
      %95 = vst [vmem:[#allocation2 + $0x108] sm:$0xff] 0.0
      %96 = vst [vmem:[#allocation2 + $0x110] sm:$0xff] 0.0
      %97 = vst [vmem:[#allocation2 + $0x118] sm:$0xff] 0.0
      %98 = vst [vmem:[#allocation2 + $0x120] sm:$0xff] 0.0
      %99 = vst [vmem:[#allocation2 + $0x128] sm:$0xff] 0.0
      %100 = vst [vmem:[#allocation2 + $0x130] sm:$0xff] 0.0
      %101 = vst [vmem:[#allocation2 + $0x138] sm:$0xff] 0.0
      %102 = vst [vmem:[#allocation2 + $0x140] sm:$0xff] 0.0
      %103 = vst [vmem:[#allocation2 + $0x148] sm:$0xff] 0.0
      %104 = vst [vmem:[#allocation2 + $0x150] sm:$0xff] 0.0
      %105 = vst [vmem:[#allocation2 + $0x158] sm:$0xff] 0.0
      %106 = vst [vmem:[#allocation2 + $0x160] sm:$0xff] 0.0
      %107 = vst [vmem:[#allocation2 + $0x168] sm:$0xff] 0.0
      %108 = vst [vmem:[#allocation2 + $0x170] sm:$0xff] 0.0
      %109 = vst [vmem:[#allocation2 + $0x178] sm:$0xff] 0.0
      %110 = vst [vmem:[#allocation2 + $0x180] sm:$0xff] 0.0
      %111 = vst [vmem:[#allocation2 + $0x188] sm:$0xff] 0.0
      %112 = vst [vmem:[#allocation2 + $0x190] sm:$0xff] 0.0
      %113 = vst [vmem:[#allocation2 + $0x198] sm:$0xff] 0.0
      %114 = vst [vmem:[#allocation2 + $0x1a0] sm:$0xff] 0.0
      %115 = vst [vmem:[#allocation2 + $0x1a8] sm:$0xff] 0.0
      %116 = vst [vmem:[#allocation2 + $0x1b0] sm:$0xff] 0.0
      %117 = vst [vmem:[#allocation2 + $0x1b8] sm:$0xff] 0.0
      %118 = vst [vmem:[#allocation2 + $0x1c0] sm:$0xff] 0.0
      %119 = vst [vmem:[#allocation2 + $0x1c8] sm:$0xff] 0.0
      %120 = vst [vmem:[#allocation2 + $0x1d0] sm:$0xff] 0.0
      %121 = vst [vmem:[#allocation2 + $0x1d8] sm:$0xff] 0.0
      %122 = vst [vmem:[#allocation2 + $0x1e0] sm:$0xff] 0.0
      %123 = vst [vmem:[#allocation2 + $0x1e8] sm:$0xff] 0.0
      %124 = vst [vmem:[#allocation2 + $0x1f0] sm:$0xff] 0.0
      %125 = vst [vmem:[#allocation2 + $0x1f8] sm:$0xff] 0.0
    $region33: #{tpu_custom_call.1} parent=1 // pred_fallthru
      _
    %v126 = vld [vmem:[#allocation2] sm:$0xff]
    %v127 = vld [vmem:[#allocation2 + $0x8] sm:$0xff]
    %v128 = vld [vmem:[#allocation2 + $0x10] sm:$0xff]
    %v129 = vld [vmem:[#allocation2 + $0x18] sm:$0xff]
    %v130 = vld [vmem:[#allocation2 + $0x20] sm:$0xff]
    %v131 = vld [vmem:[#allocation2 + $0x28] sm:$0xff]
    %v132 = vld [vmem:[#allocation2 + $0x30] sm:$0xff]
    %v133 = vld [vmem:[#allocation2 + $0x38] sm:$0xff]
    %v134 = vld [vmem:[#allocation2 + $0x40] sm:$0xff]
    %v135 = vld [vmem:[#allocation2 + $0x48] sm:$0xff]
    %v136 = vld [vmem:[#allocation2 + $0x50] sm:$0xff]
    %v137 = vld [vmem:[#allocation2 + $0x58] sm:$0xff]
    %v138 = vld [vmem:[#allocation2 + $0x60] sm:$0xff]
    %v139 = vld [vmem:[#allocation2 + $0x68] sm:$0xff]
    %v140 = vld [vmem:[#allocation2 + $0x70] sm:$0xff]
    %v141 = vld [vmem:[#allocation2 + $0x78] sm:$0xff]
    %v142 = vld [vmem:[#allocation2 + $0x80] sm:$0xff]
    %v143 = vld [vmem:[#allocation2 + $0x88] sm:$0xff]
    %v144 = vld [vmem:[#allocation2 + $0x90] sm:$0xff]
    %v145 = vld [vmem:[#allocation2 + $0x98] sm:$0xff]
    %v146 = vld [vmem:[#allocation2 + $0xa0] sm:$0xff]
    %v147 = vld [vmem:[#allocation2 + $0xa8] sm:$0xff]
    %v148 = vld [vmem:[#allocation2 + $0xb0] sm:$0xff]
    %v149 = vld [vmem:[#allocation2 + $0xb8] sm:$0xff]
    %v150 = vld [vmem:[#allocation2 + $0xc0] sm:$0xff]
    %v151 = vld [vmem:[#allocation2 + $0xc8] sm:$0xff]
    %v152 = vld [vmem:[#allocation2 + $0xd0] sm:$0xff]
    %v153 = vld [vmem:[#allocation2 + $0xd8] sm:$0xff]
    %v154 = vld [vmem:[#allocation2 + $0xe0] sm:$0xff]
    %v155 = vld [vmem:[#allocation2 + $0xe8] sm:$0xff]
    %v156 = vld [vmem:[#allocation2 + $0xf0] sm:$0xff]
    %v157 = vld [vmem:[#allocation2 + $0xf8] sm:$0xff]
    %v158 = vld [vmem:[#allocation2 + $0x100] sm:$0xff]
    %v159 = vld [vmem:[#allocation2 + $0x108] sm:$0xff]
    %v160 = vld [vmem:[#allocation2 + $0x110] sm:$0xff]
    %v161 = vld [vmem:[#allocation2 + $0x118] sm:$0xff]
    %v162 = vld [vmem:[#allocation2 + $0x120] sm:$0xff]
    %v163 = vld [vmem:[#allocation2 + $0x128] sm:$0xff]
    %v164 = vld [vmem:[#allocation2 + $0x130] sm:$0xff]
    %v165 = vld [vmem:[#allocation2 + $0x138] sm:$0xff]
    %v166 = vld [vmem:[#allocation2 + $0x140] sm:$0xff]
    %v167 = vld [vmem:[#allocation2 + $0x148] sm:$0xff]
    %v168 = vld [vmem:[#allocation2 + $0x150] sm:$0xff]
    %v169 = vld [vmem:[#allocation2 + $0x158] sm:$0xff]
    %v170 = vld [vmem:[#allocation2 + $0x160] sm:$0xff]
    %v171 = vld [vmem:[#allocation2 + $0x168] sm:$0xff]
    %v172 = vld [vmem:[#allocation2 + $0x170] sm:$0xff]
    %v173 = vld [vmem:[#allocation2 + $0x178] sm:$0xff]
    %v174 = vld [vmem:[#allocation2 + $0x180] sm:$0xff]
    %v175 = vld [vmem:[#allocation2 + $0x188] sm:$0xff]
    %v176 = vld [vmem:[#allocation2 + $0x190] sm:$0xff]
    %v177 = vld [vmem:[#allocation2 + $0x198] sm:$0xff]
    %v178 = vld [vmem:[#allocation2 + $0x1a0] sm:$0xff]
    %v179 = vld [vmem:[#allocation2 + $0x1a8] sm:$0xff]
    %v180 = vld [vmem:[#allocation2 + $0x1b0] sm:$0xff]
    %v181 = vld [vmem:[#allocation2 + $0x1b8] sm:$0xff]
    %v182 = vld [vmem:[#allocation2 + $0x1c0] sm:$0xff]
    %v183 = vld [vmem:[#allocation2 + $0x1c8] sm:$0xff]
    %v184 = vld [vmem:[#allocation2 + $0x1d0] sm:$0xff]
    %v185 = vld [vmem:[#allocation2 + $0x1d8] sm:$0xff]
    %v186 = vld [vmem:[#allocation2 + $0x1e0] sm:$0xff]
    %v187 = vld [vmem:[#allocation2 + $0x1e8] sm:$0xff]
    %v188 = vld [vmem:[#allocation2 + $0x1f0] sm:$0xff]
    %v189 = vld [vmem:[#allocation2 + $0x1f8] sm:$0xff]
    %v190 = vld [vmem:[#allocation3] sm:$0xf]
    %v191 = vld [vmem:[#allocation3 + $0x4] sm:$0xf]
    %v192 = vld [vmem:[#allocation3 + $0x8] sm:$0xf]
    %v193 = vld [vmem:[#allocation3 + $0xc] sm:$0xf]
    %v194 = vld [vmem:[#allocation3 + $0x10] sm:$0xf]
    %v195 = vld [vmem:[#allocation3 + $0x14] sm:$0xf]
    %v196 = vld [vmem:[#allocation3 + $0x18] sm:$0xf]
    %v197 = vld [vmem:[#allocation3 + $0x1c] sm:$0xf]
    %v198 = vld [vmem:[#allocation3 + $0x20] sm:$0xf]
    %v199 = vld [vmem:[#allocation3 + $0x24] sm:$0xf]
    %v200 = vld [vmem:[#allocation3 + $0x28] sm:$0xf]
    %v201 = vld [vmem:[#allocation3 + $0x2c] sm:$0xf]
    %v202 = vld [vmem:[#allocation3 + $0x30] sm:$0xf]
    %v203 = vld [vmem:[#allocation3 + $0x34] sm:$0xf]
    %v204 = vld [vmem:[#allocation3 + $0x38] sm:$0xf]
    %v205 = vld [vmem:[#allocation3 + $0x3c] sm:$0xf]
    %v206 = vld [vmem:[#allocation3 + $0x40] sm:$0xf]
    %v207 = vld [vmem:[#allocation3 + $0x44] sm:$0xf]
    %v208 = vld [vmem:[#allocation3 + $0x48] sm:$0xf]
    %v209 = vld [vmem:[#allocation3 + $0x4c] sm:$0xf]
    %v210 = vld [vmem:[#allocation3 + $0x50] sm:$0xf]
    %v211 = vld [vmem:[#allocation3 + $0x54] sm:$0xf]
    %v212 = vld [vmem:[#allocation3 + $0x58] sm:$0xf]
    %v213 = vld [vmem:[#allocation3 + $0x5c] sm:$0xf]
    %v214 = vld [vmem:[#allocation3 + $0x60] sm:$0xf]
    %v215 = vld [vmem:[#allocation3 + $0x64] sm:$0xf]
    %v216 = vld [vmem:[#allocation3 + $0x68] sm:$0xf]
    %v217 = vld [vmem:[#allocation3 + $0x6c] sm:$0xf]
    %v218 = vld [vmem:[#allocation3 + $0x70] sm:$0xf]
    %v219 = vld [vmem:[#allocation3 + $0x74] sm:$0xf]
    %v220 = vld [vmem:[#allocation3 + $0x78] sm:$0xf]
    %v221 = vld [vmem:[#allocation3 + $0x7c] sm:$0xf]
    %v222 = vld [vmem:[#allocation3 + $0x80] sm:$0xf]
    %v223 = vld [vmem:[#allocation3 + $0x84] sm:$0xf]
    %v224 = vld [vmem:[#allocation3 + $0x88] sm:$0xf]
    %v225 = vld [vmem:[#allocation3 + $0x8c] sm:$0xf]
    %v226 = vld [vmem:[#allocation3 + $0x90] sm:$0xf]
    %v227 = vld [vmem:[#allocation3 + $0x94] sm:$0xf]
    %v228 = vld [vmem:[#allocation3 + $0x98] sm:$0xf]
    %v229 = vld [vmem:[#allocation3 + $0x9c] sm:$0xf]
    %v230 = vld [vmem:[#allocation3 + $0xa0] sm:$0xf]
    %v231 = vld [vmem:[#allocation3 + $0xa4] sm:$0xf]
    %v232 = vld [vmem:[#allocation3 + $0xa8] sm:$0xf]
    %v233 = vld [vmem:[#allocation3 + $0xac] sm:$0xf]
    %v234 = vld [vmem:[#allocation3 + $0xb0] sm:$0xf]
    %v235 = vld [vmem:[#allocation3 + $0xb4] sm:$0xf]
    %v236 = vld [vmem:[#allocation3 + $0xb8] sm:$0xf]
    %v237 = vld [vmem:[#allocation3 + $0xbc] sm:$0xf]
    %v238 = vld [vmem:[#allocation3 + $0xc0] sm:$0xf]
    %v239 = vld [vmem:[#allocation3 + $0xc4] sm:$0xf]
    %v240 = vld [vmem:[#allocation3 + $0xc8] sm:$0xf]
    %v241 = vld [vmem:[#allocation3 + $0xcc] sm:$0xf]
    %v242 = vld [vmem:[#allocation3 + $0xd0] sm:$0xf]
    %v243 = vld [vmem:[#allocation3 + $0xd4] sm:$0xf]
    %v244 = vld [vmem:[#allocation3 + $0xd8] sm:$0xf]
    %v245 = vld [vmem:[#allocation3 + $0xdc] sm:$0xf]
    %v246 = vld [vmem:[#allocation3 + $0xe0] sm:$0xf]
    %v247 = vld [vmem:[#allocation3 + $0xe4] sm:$0xf]
    %v248 = vld [vmem:[#allocation3 + $0xe8] sm:$0xf]
    %v249 = vld [vmem:[#allocation3 + $0xec] sm:$0xf]
    %v250 = vld [vmem:[#allocation3 + $0xf0] sm:$0xf]
    %v251 = vld [vmem:[#allocation3 + $0xf4] sm:$0xf]
    %v252 = vld [vmem:[#allocation3 + $0xf8] sm:$0xf]
    %v253 = vld [vmem:[#allocation3 + $0xfc] sm:$0xf]
    %v254 = vld [vmem:[#allocation6] sm:$0xf]
    %v255 = vld [vmem:[#allocation6 + $0x4] sm:$0xf]
    %v256 = vld [vmem:[#allocation6 + $0x8] sm:$0xf]
    %v257 = vld [vmem:[#allocation6 + $0xc] sm:$0xf]
    %v258 = vld [vmem:[#allocation6 + $0x10] sm:$0xf]
    %v259 = vld [vmem:[#allocation6 + $0x14] sm:$0xf]
    %v260 = vld [vmem:[#allocation6 + $0x18] sm:$0xf]
    %v261 = vld [vmem:[#allocation6 + $0x1c] sm:$0xf]
    %v262 = vld [vmem:[#allocation6 + $0x20] sm:$0xf]
    %v263 = vld [vmem:[#allocation6 + $0x24] sm:$0xf]
    %v264 = vld [vmem:[#allocation6 + $0x28] sm:$0xf]
    %v265 = vld [vmem:[#allocation6 + $0x2c] sm:$0xf]
    %v266 = vld [vmem:[#allocation6 + $0x30] sm:$0xf]
    %v267 = vld [vmem:[#allocation6 + $0x34] sm:$0xf]
    %v268 = vld [vmem:[#allocation6 + $0x38] sm:$0xf]
    %v269 = vld [vmem:[#allocation6 + $0x3c] sm:$0xf]
    %v334 = vunpack.c.l.b16 %v190
    %v335 = vunpack.c.l.b16 %v191
    %v336 = vunpack.c.l.b16 %v192
    %v337 = vunpack.c.l.b16 %v193
    %v338 = vunpack.c.l.b16 %v194
    %v339 = vunpack.c.l.b16 %v195
    %v340 = vunpack.c.l.b16 %v196
    %v341 = vunpack.c.l.b16 %v197
    %v342 = vunpack.c.l.b16 %v198
    %v343 = vunpack.c.l.b16 %v199
    %v344 = vunpack.c.l.b16 %v200
    %v345 = vunpack.c.l.b16 %v201
    %v346 = vunpack.c.l.b16 %v202
    %v347 = vunpack.c.l.b16 %v203
    %v348 = vunpack.c.l.b16 %v204
    %v349 = vunpack.c.l.b16 %v205
    %v350 = vunpack.c.l.b16 %v206
    %v351 = vunpack.c.l.b16 %v207
    %v352 = vunpack.c.l.b16 %v208
    %v353 = vunpack.c.l.b16 %v209
    %v354 = vunpack.c.l.b16 %v210
    %v355 = vunpack.c.l.b16 %v211
    %v356 = vunpack.c.l.b16 %v212
    %v357 = vunpack.c.l.b16 %v213
    %v358 = vunpack.c.l.b16 %v214
    %v359 = vunpack.c.l.b16 %v215
    %v360 = vunpack.c.l.b16 %v216
    %v361 = vunpack.c.l.b16 %v217
    %v362 = vunpack.c.l.b16 %v218
    %v363 = vunpack.c.l.b16 %v219
    %v364 = vunpack.c.l.b16 %v220
    %v365 = vunpack.c.l.b16 %v221
    %v366 = vunpack.c.l.b16 %v222
    %v367 = vunpack.c.l.b16 %v223
    %v368 = vunpack.c.l.b16 %v224
    %v369 = vunpack.c.l.b16 %v225
    %v370 = vunpack.c.l.b16 %v226
    %v371 = vunpack.c.l.b16 %v227
    %v372 = vunpack.c.l.b16 %v228
    %v373 = vunpack.c.l.b16 %v229
    %v374 = vunpack.c.l.b16 %v230
    %v375 = vunpack.c.l.b16 %v231
    %v376 = vunpack.c.l.b16 %v232
    %v377 = vunpack.c.l.b16 %v233
    %v378 = vunpack.c.l.b16 %v234
    %v379 = vunpack.c.l.b16 %v235
    %v380 = vunpack.c.l.b16 %v236
    %v381 = vunpack.c.l.b16 %v237
    %v382 = vunpack.c.l.b16 %v238
    %v383 = vunpack.c.l.b16 %v239
    %v384 = vunpack.c.l.b16 %v240
    %v385 = vunpack.c.l.b16 %v241
    %v386 = vunpack.c.l.b16 %v242
    %v387 = vunpack.c.l.b16 %v243
    %v388 = vunpack.c.l.b16 %v244
    %v389 = vunpack.c.l.b16 %v245
    %v390 = vunpack.c.l.b16 %v246
    %v391 = vunpack.c.l.b16 %v247
    %v392 = vunpack.c.l.b16 %v248
    %v393 = vunpack.c.l.b16 %v249
    %v394 = vunpack.c.l.b16 %v250
    %v395 = vunpack.c.l.b16 %v251
    %v396 = vunpack.c.l.b16 %v252
    %v397 = vunpack.c.l.b16 %v253
    %v398 = vpack.c.b16 %v335, %v334
    %v399 = vpack.c.b16 %v337, %v336
    %v400 = vpack.c.b16 %v339, %v338
    %v401 = vpack.c.b16 %v341, %v340
    %v402 = vpack.c.b16 %v343, %v342
    %v403 = vpack.c.b16 %v345, %v344
    %v404 = vpack.c.b16 %v347, %v346
    %v405 = vpack.c.b16 %v349, %v348
    %v406 = vpack.c.b16 %v351, %v350
    %v407 = vpack.c.b16 %v353, %v352
    %v408 = vpack.c.b16 %v355, %v354
    %v409 = vpack.c.b16 %v357, %v356
    %v410 = vpack.c.b16 %v359, %v358
    %v411 = vpack.c.b16 %v361, %v360
    %v412 = vpack.c.b16 %v363, %v362
    %v413 = vpack.c.b16 %v365, %v364
    %v414 = vpack.c.b16 %v367, %v366
    %v415 = vpack.c.b16 %v369, %v368
    %v416 = vpack.c.b16 %v371, %v370
    %v417 = vpack.c.b16 %v373, %v372
    %v418 = vpack.c.b16 %v375, %v374
    %v419 = vpack.c.b16 %v377, %v376
    %v420 = vpack.c.b16 %v379, %v378
    %v421 = vpack.c.b16 %v381, %v380
    %v422 = vpack.c.b16 %v383, %v382
    %v423 = vpack.c.b16 %v385, %v384
    %v424 = vpack.c.b16 %v387, %v386
    %v425 = vpack.c.b16 %v389, %v388
    %v426 = vpack.c.b16 %v391, %v390
    %v427 = vpack.c.b16 %v393, %v392
    %v428 = vpack.c.b16 %v395, %v394
    %v429 = vpack.c.b16 %v397, %v396
    %v478 = vunpack.c.l.b16 %v254
    %v479 = vunpack.c.l.b16 %v255
    %v480 = vunpack.c.l.b16 %v256
    %v481 = vunpack.c.l.b16 %v257
    %v482 = vunpack.c.l.b16 %v258
    %v483 = vunpack.c.l.b16 %v259
    %v484 = vunpack.c.l.b16 %v260
    %v485 = vunpack.c.l.b16 %v261
    %v486 = vunpack.c.l.b16 %v262
    %v487 = vunpack.c.l.b16 %v263
    %v488 = vunpack.c.l.b16 %v264
    %v489 = vunpack.c.l.b16 %v265
    %v490 = vunpack.c.l.b16 %v266
    %v491 = vunpack.c.l.b16 %v267
    %v492 = vunpack.c.l.b16 %v268
    %v493 = vunpack.c.l.b16 %v269
    %v494 = vpack.c.b16 %v479, %v478
    %v495 = vpack.c.b16 %v481, %v480
    %v496 = vpack.c.b16 %v483, %v482
    %v497 = vpack.c.b16 %v485, %v484
    %v498 = vpack.c.b16 %v487, %v486
    %v499 = vpack.c.b16 %v489, %v488
    %v500 = vpack.c.b16 %v491, %v490
    %v501 = vpack.c.b16 %v493, %v492
    %510 = vmatprep.subr.bf16.mxu0 0
    %511 = vmatpush1.bf16.msra.mxu0 %v494
    %512 = vmatprep.subr.bf16.mxu0 0
    %513 = vmatpush1.bf16.msra.mxu0 %v495
    %514 = vmatprep.subr.bf16.mxu0 0
    %515 = vmatpush1.bf16.msra.mxu0 %v496
    %516 = vmatprep.subr.bf16.mxu0 0
    %517 = vmatpush1.bf16.msra.mxu0 %v497
    %518 = vmatprep.subr.bf16.mxu0 0
    %519 = vmatpush1.bf16.msra.mxu0 %v498
    %520 = vmatprep.subr.bf16.mxu0 0
    %521 = vmatpush1.bf16.msra.mxu0 %v499
    %522 = vmatprep.subr.bf16.mxu0 0
    %523 = vmatpush1.bf16.msra.mxu0 %v500
    %524 = vmatprep.subr.bf16.mxu0 0
    %525 = vmatpush1.bf16.msra.mxu0 %v501
    %526 = vmatprep.subr.bf16.mxu0 0
    %527 = vmatpush1.bf16.msra.mxu0 0
    %528 = vmatprep.subr.bf16.mxu0 0
    %529 = vmatpush1.bf16.msra.mxu0 0
    %530 = vmatprep.subr.bf16.mxu0 0
    %531 = vmatpush1.bf16.msra.mxu0 0
    %532 = vmatprep.subr.bf16.mxu0 0
    %533 = vmatpush1.bf16.msra.mxu0 0
    %534 = vmatprep.subr.bf16.mxu0 0
    %535 = vmatpush1.bf16.msra.mxu0 0
    %536 = vmatprep.subr.bf16.mxu0 0
    %537 = vmatpush1.bf16.msra.mxu0 0
    %538 = vmatprep.subr.bf16.mxu0 0
    %539 = vmatpush1.bf16.msra.mxu0 0
    %540 = vmatprep.subr.bf16.mxu0 0
    %541 = vmatpush1.bf16.msra.mxu0 0
    %542 = vmatprep.mubr.bf16.mxu0 0
    %543 = vmatmul.mubr.bf16.gmra.mrb[0].mxu0 %v398
    %v544 = vpop.f32.mrb[0].mxu0
    %v545 = vadd.f32 0.0, %v544
    %v546 = vpop.f32.mrb[0].mxu0
    %v547 = vpop.f32.mrb[0].mxu0
    %v548 = vadd.f32 0.0, %v547
    %v549 = vpop.f32.mrb[0].mxu0
    %550 = vmatprep.mubr.bf16.mxu0 0
    %551 = vmatmul.mubr.bf16.gmra.mrb[0].mxu0 %v399
    %v552 = vpop.f32.mrb[0].mxu0
    %v553 = vadd.f32 0.0, %v552
    %v554 = vpop.f32.mrb[0].mxu0
    %v555 = vpop.f32.mrb[0].mxu0
    %v556 = vadd.f32 0.0, %v555
    %v557 = vpop.f32.mrb[0].mxu0
    %558 = vmatprep.mubr.bf16.mxu0 0
    %559 = vmatmul.mubr.bf16.gmra.mrb[0].mxu0 %v400
    %v560 = vpop.f32.mrb[0].mxu0
    %v561 = vadd.f32 0.0, %v560
    %v562 = vpop.f32.mrb[0].mxu0
    %v563 = vpop.f32.mrb[0].mxu0
    %v564 = vadd.f32 0.0, %v563
    %v565 = vpop.f32.mrb[0].mxu0
    %566 = vmatprep.mubr.bf16.mxu0 0
    %567 = vmatmul.mubr.bf16.gmra.mrb[0].mxu0 %v401
    %v568 = vpop.f32.mrb[0].mxu0
    %v569 = vadd.f32 0.0, %v568
    %v570 = vpop.f32.mrb[0].mxu0
    %v571 = vpop.f32.mrb[0].mxu0
    %v572 = vadd.f32 0.0, %v571
    %v573 = vpop.f32.mrb[0].mxu0
    %574 = vmatprep.mubr.bf16.mxu0 0
    %575 = vmatmul.mubr.bf16.gmra.mrb[0].mxu0 %v402
    %v576 = vpop.f32.mrb[0].mxu0
    %v577 = vadd.f32 0.0, %v576
    %v578 = vpop.f32.mrb[0].mxu0
    %v579 = vpop.f32.mrb[0].mxu0
    %v580 = vadd.f32 0.0, %v579
    %v581 = vpop.f32.mrb[0].mxu0
    %582 = vmatprep.mubr.bf16.mxu0 0
    %583 = vmatmul.mubr.bf16.gmra.mrb[0].mxu0 %v403
    %v584 = vpop.f32.mrb[0].mxu0
    %v585 = vadd.f32 0.0, %v584
    %v586 = vpop.f32.mrb[0].mxu0
    %v587 = vpop.f32.mrb[0].mxu0
    %v588 = vadd.f32 0.0, %v587
    %v589 = vpop.f32.mrb[0].mxu0
    %590 = vmatprep.mubr.bf16.mxu0 0
    %591 = vmatmul.mubr.bf16.gmra.mrb[0].mxu0 %v404
    %v592 = vpop.f32.mrb[0].mxu0
    %v593 = vadd.f32 0.0, %v592
    %v594 = vpop.f32.mrb[0].mxu0
    %v595 = vpop.f32.mrb[0].mxu0
    %v596 = vadd.f32 0.0, %v595
    %v597 = vpop.f32.mrb[0].mxu0
    %598 = vmatprep.mubr.bf16.mxu0 0
    %599 = vmatmul.mubr.bf16.gmra.mrb[0].mxu0 %v405
    %v600 = vpop.f32.mrb[0].mxu0
    %v601 = vadd.f32 0.0, %v600
    %v602 = vpop.f32.mrb[0].mxu0
    %v603 = vpop.f32.mrb[0].mxu0
    %v604 = vadd.f32 0.0, %v603
    %v605 = vpop.f32.mrb[0].mxu0
    %606 = vmatprep.mubr.bf16.mxu0 0
    %607 = vmatmul.mubr.bf16.gmra.mrb[0].mxu0 %v406
    %v608 = vpop.f32.mrb[0].mxu0
    %v609 = vadd.f32 0.0, %v608
    %v610 = vpop.f32.mrb[0].mxu0
    %v611 = vpop.f32.mrb[0].mxu0
    %v612 = vadd.f32 0.0, %v611
    %v613 = vpop.f32.mrb[0].mxu0
    %614 = vmatprep.mubr.bf16.mxu0 0
    %615 = vmatmul.mubr.bf16.gmra.mrb[0].mxu0 %v407
    %v616 = vpop.f32.mrb[0].mxu0
    %v617 = vadd.f32 0.0, %v616
    %v618 = vpop.f32.mrb[0].mxu0
    %v619 = vpop.f32.mrb[0].mxu0
    %v620 = vadd.f32 0.0, %v619
    %v621 = vpop.f32.mrb[0].mxu0
    %622 = vmatprep.mubr.bf16.mxu0 0
    %623 = vmatmul.mubr.bf16.gmra.mrb[0].mxu0 %v408
    %v624 = vpop.f32.mrb[0].mxu0
    %v625 = vadd.f32 0.0, %v624
    %v626 = vpop.f32.mrb[0].mxu0
    %v627 = vpop.f32.mrb[0].mxu0
    %v628 = vadd.f32 0.0, %v627
    %v629 = vpop.f32.mrb[0].mxu0
    %630 = vmatprep.mubr.bf16.mxu0 0
    %631 = vmatmul.mubr.bf16.gmra.mrb[0].mxu0 %v409
    %v632 = vpop.f32.mrb[0].mxu0
    %v633 = vadd.f32 0.0, %v632
    %v634 = vpop.f32.mrb[0].mxu0
    %v635 = vpop.f32.mrb[0].mxu0
    %v636 = vadd.f32 0.0, %v635
    %v637 = vpop.f32.mrb[0].mxu0
    %638 = vmatprep.mubr.bf16.mxu0 0
    %639 = vmatmul.mubr.bf16.gmra.mrb[0].mxu0 %v410
    %v640 = vpop.f32.mrb[0].mxu0
    %v641 = vadd.f32 0.0, %v640
    %v642 = vpop.f32.mrb[0].mxu0
    %v643 = vpop.f32.mrb[0].mxu0
    %v644 = vadd.f32 0.0, %v643
    %v645 = vpop.f32.mrb[0].mxu0
    %646 = vmatprep.mubr.bf16.mxu0 0
    %647 = vmatmul.mubr.bf16.gmra.mrb[0].mxu0 %v411
    %v648 = vpop.f32.mrb[0].mxu0
    %v649 = vadd.f32 0.0, %v648
    %v650 = vpop.f32.mrb[0].mxu0
    %v651 = vpop.f32.mrb[0].mxu0
    %v652 = vadd.f32 0.0, %v651
    %v653 = vpop.f32.mrb[0].mxu0
    %654 = vmatprep.mubr.bf16.mxu0 0
    %655 = vmatmul.mubr.bf16.gmra.mrb[0].mxu0 %v412
    %v656 = vpop.f32.mrb[0].mxu0
    %v657 = vadd.f32 0.0, %v656
    %v658 = vpop.f32.mrb[0].mxu0
    %v659 = vpop.f32.mrb[0].mxu0
    %v660 = vadd.f32 0.0, %v659
    %v661 = vpop.f32.mrb[0].mxu0
    %662 = vmatprep.mubr.bf16.mxu0 0
    %663 = vmatmul.mubr.bf16.gmra.mrb[0].mxu0 %v413
    %v664 = vpop.f32.mrb[0].mxu0
    %v665 = vadd.f32 0.0, %v664
    %v666 = vpop.f32.mrb[0].mxu0
    %v667 = vpop.f32.mrb[0].mxu0
    %v668 = vadd.f32 0.0, %v667
    %v669 = vpop.f32.mrb[0].mxu0
    %670 = vmatprep.mubr.bf16.mxu0 0
    %671 = vmatmul.mubr.bf16.gmra.mrb[0].mxu0 %v414
    %v672 = vpop.f32.mrb[0].mxu0
    %v673 = vadd.f32 0.0, %v672
    %v674 = vpop.f32.mrb[0].mxu0
    %v675 = vpop.f32.mrb[0].mxu0
    %v676 = vadd.f32 0.0, %v675
    %v677 = vpop.f32.mrb[0].mxu0
    %678 = vmatprep.mubr.bf16.mxu0 0
    %679 = vmatmul.mubr.bf16.gmra.mrb[0].mxu0 %v415
    %v680 = vpop.f32.mrb[0].mxu0
    %v681 = vadd.f32 0.0, %v680
    %v682 = vpop.f32.mrb[0].mxu0
    %v683 = vpop.f32.mrb[0].mxu0
    %v684 = vadd.f32 0.0, %v683
    %v685 = vpop.f32.mrb[0].mxu0
    %686 = vmatprep.mubr.bf16.mxu0 0
    %687 = vmatmul.mubr.bf16.gmra.mrb[0].mxu0 %v416
    %v688 = vpop.f32.mrb[0].mxu0
    %v689 = vadd.f32 0.0, %v688
    %v690 = vpop.f32.mrb[0].mxu0
    %v691 = vpop.f32.mrb[0].mxu0
    %v692 = vadd.f32 0.0, %v691
    %v693 = vpop.f32.mrb[0].mxu0
    %694 = vmatprep.mubr.bf16.mxu0 0
    %695 = vmatmul.mubr.bf16.gmra.mrb[0].mxu0 %v417
    %v696 = vpop.f32.mrb[0].mxu0
    %v697 = vadd.f32 0.0, %v696
    %v698 = vpop.f32.mrb[0].mxu0
    %v699 = vpop.f32.mrb[0].mxu0
    %v700 = vadd.f32 0.0, %v699
    %v701 = vpop.f32.mrb[0].mxu0
    %702 = vmatprep.mubr.bf16.mxu0 0
    %703 = vmatmul.mubr.bf16.gmra.mrb[0].mxu0 %v418
    %v704 = vpop.f32.mrb[0].mxu0
    %v705 = vadd.f32 0.0, %v704
    %v706 = vpop.f32.mrb[0].mxu0
    %v707 = vpop.f32.mrb[0].mxu0
    %v708 = vadd.f32 0.0, %v707
    %v709 = vpop.f32.mrb[0].mxu0
    %710 = vmatprep.mubr.bf16.mxu0 0
    %711 = vmatmul.mubr.bf16.gmra.mrb[0].mxu0 %v419
    %v712 = vpop.f32.mrb[0].mxu0
    %v713 = vadd.f32 0.0, %v712
    %v714 = vpop.f32.mrb[0].mxu0
    %v715 = vpop.f32.mrb[0].mxu0
    %v716 = vadd.f32 0.0, %v715
    %v717 = vpop.f32.mrb[0].mxu0
    %718 = vmatprep.mubr.bf16.mxu0 0
    %719 = vmatmul.mubr.bf16.gmra.mrb[0].mxu0 %v420
    %v720 = vpop.f32.mrb[0].mxu0
    %v721 = vadd.f32 0.0, %v720
    %v722 = vpop.f32.mrb[0].mxu0
    %v723 = vpop.f32.mrb[0].mxu0
    %v724 = vadd.f32 0.0, %v723
    %v725 = vpop.f32.mrb[0].mxu0
    %726 = vmatprep.mubr.bf16.mxu0 0
    %727 = vmatmul.mubr.bf16.gmra.mrb[0].mxu0 %v421
    %v728 = vpop.f32.mrb[0].mxu0
    %v729 = vadd.f32 0.0, %v728
    %v730 = vpop.f32.mrb[0].mxu0
    %v731 = vpop.f32.mrb[0].mxu0
    %v732 = vadd.f32 0.0, %v731
    %v733 = vpop.f32.mrb[0].mxu0
    %734 = vmatprep.mubr.bf16.mxu0 0
    %735 = vmatmul.mubr.bf16.gmra.mrb[0].mxu0 %v422
    %v736 = vpop.f32.mrb[0].mxu0
    %v737 = vadd.f32 0.0, %v736
    %v738 = vpop.f32.mrb[0].mxu0
    %v739 = vpop.f32.mrb[0].mxu0
    %v740 = vadd.f32 0.0, %v739
    %v741 = vpop.f32.mrb[0].mxu0
    %742 = vmatprep.mubr.bf16.mxu0 0
    %743 = vmatmul.mubr.bf16.gmra.mrb[0].mxu0 %v423
    %v744 = vpop.f32.mrb[0].mxu0
    %v745 = vadd.f32 0.0, %v744
    %v746 = vpop.f32.mrb[0].mxu0
    %v747 = vpop.f32.mrb[0].mxu0
    %v748 = vadd.f32 0.0, %v747
    %v749 = vpop.f32.mrb[0].mxu0
    %750 = vmatprep.mubr.bf16.mxu0 0
    %751 = vmatmul.mubr.bf16.gmra.mrb[0].mxu0 %v424
    %v752 = vpop.f32.mrb[0].mxu0
    %v753 = vadd.f32 0.0, %v752
    %v754 = vpop.f32.mrb[0].mxu0
    %v755 = vpop.f32.mrb[0].mxu0
    %v756 = vadd.f32 0.0, %v755
    %v757 = vpop.f32.mrb[0].mxu0
    %758 = vmatprep.mubr.bf16.mxu0 0
    %759 = vmatmul.mubr.bf16.gmra.mrb[0].mxu0 %v425
    %v760 = vpop.f32.mrb[0].mxu0
    %v761 = vadd.f32 0.0, %v760
    %v762 = vpop.f32.mrb[0].mxu0
    %v763 = vpop.f32.mrb[0].mxu0
    %v764 = vadd.f32 0.0, %v763
    %v765 = vpop.f32.mrb[0].mxu0
    %766 = vmatprep.mubr.bf16.mxu0 0
    %767 = vmatmul.mubr.bf16.gmra.mrb[0].mxu0 %v426
    %v768 = vpop.f32.mrb[0].mxu0
    %v769 = vadd.f32 0.0, %v768
    %v770 = vpop.f32.mrb[0].mxu0
    %v771 = vpop.f32.mrb[0].mxu0
    %v772 = vadd.f32 0.0, %v771
    %v773 = vpop.f32.mrb[0].mxu0
    %774 = vmatprep.mubr.bf16.mxu0 0
    %775 = vmatmul.mubr.bf16.gmra.mrb[0].mxu0 %v427
    %v776 = vpop.f32.mrb[0].mxu0
    %v777 = vadd.f32 0.0, %v776
    %v778 = vpop.f32.mrb[0].mxu0
    %v779 = vpop.f32.mrb[0].mxu0
    %v780 = vadd.f32 0.0, %v779
    %v781 = vpop.f32.mrb[0].mxu0
    %782 = vmatprep.mubr.bf16.mxu0 0
    %783 = vmatmul.mubr.bf16.gmra.mrb[0].mxu0 %v428
    %v784 = vpop.f32.mrb[0].mxu0
    %v785 = vadd.f32 0.0, %v784
    %v786 = vpop.f32.mrb[0].mxu0
    %v787 = vpop.f32.mrb[0].mxu0
    %v788 = vadd.f32 0.0, %v787
    %v789 = vpop.f32.mrb[0].mxu0
    %790 = vmatprep.mubr.bf16.mxu0 0
    %791 = vmatmul.mubr.bf16.gmra.mrb[0].mxu0 %v429
    %v792 = vpop.f32.mrb[0].mxu0
    %v793 = vadd.f32 0.0, %v792
    %v794 = vpop.f32.mrb[0].mxu0
    %v795 = vpop.f32.mrb[0].mxu0
    %v796 = vadd.f32 0.0, %v795
    %v797 = vpop.f32.mrb[0].mxu0
    %798 = vdwg.mxu0
    %v799 = vadd.f32 %v126, %v545
    %v800 = vadd.f32 %v127, %v548
    %v801 = vadd.f32 %v128, %v553
    %v802 = vadd.f32 %v129, %v556
    %v803 = vadd.f32 %v130, %v561
    %v804 = vadd.f32 %v131, %v564
    %v805 = vadd.f32 %v132, %v569
    %v806 = vadd.f32 %v133, %v572
    %v807 = vadd.f32 %v134, %v577
    %v808 = vadd.f32 %v135, %v580
    %v809 = vadd.f32 %v136, %v585
    %v810 = vadd.f32 %v137, %v588
    %v811 = vadd.f32 %v138, %v593
    %v812 = vadd.f32 %v139, %v596
    %v813 = vadd.f32 %v140, %v601
    %v814 = vadd.f32 %v141, %v604
    %v815 = vadd.f32 %v142, %v609
    %v816 = vadd.f32 %v143, %v612
    %v817 = vadd.f32 %v144, %v617
    %v818 = vadd.f32 %v145, %v620
    %v819 = vadd.f32 %v146, %v625
    %v820 = vadd.f32 %v147, %v628
    %v821 = vadd.f32 %v148, %v633
    %v822 = vadd.f32 %v149, %v636
    %v823 = vadd.f32 %v150, %v641
    %v824 = vadd.f32 %v151, %v644
    %v825 = vadd.f32 %v152, %v649
    %v826 = vadd.f32 %v153, %v652
    %v827 = vadd.f32 %v154, %v657
    %v828 = vadd.f32 %v155, %v660
    %v829 = vadd.f32 %v156, %v665
    %v830 = vadd.f32 %v157, %v668
    %v831 = vadd.f32 %v158, %v673
    %v832 = vadd.f32 %v159, %v676
    %v833 = vadd.f32 %v160, %v681
    %v834 = vadd.f32 %v161, %v684
    %v835 = vadd.f32 %v162, %v689
    %v836 = vadd.f32 %v163, %v692
    %v837 = vadd.f32 %v164, %v697
    %v838 = vadd.f32 %v165, %v700
    %v839 = vadd.f32 %v166, %v705
    %v840 = vadd.f32 %v167, %v708
    %v841 = vadd.f32 %v168, %v713
    %v842 = vadd.f32 %v169, %v716
    %v843 = vadd.f32 %v170, %v721
    %v844 = vadd.f32 %v171, %v724
    %v845 = vadd.f32 %v172, %v729
    %v846 = vadd.f32 %v173, %v732
    %v847 = vadd.f32 %v174, %v737
    %v848 = vadd.f32 %v175, %v740
    %v849 = vadd.f32 %v176, %v745
    %v850 = vadd.f32 %v177, %v748
    %v851 = vadd.f32 %v178, %v753
    %v852 = vadd.f32 %v179, %v756
    %v853 = vadd.f32 %v180, %v761
    %v854 = vadd.f32 %v181, %v764
    %v855 = vadd.f32 %v182, %v769
    %v856 = vadd.f32 %v183, %v772
    %v857 = vadd.f32 %v184, %v777
    %v858 = vadd.f32 %v185, %v780
    %v859 = vadd.f32 %v186, %v785
    %v860 = vadd.f32 %v187, %v788
    %v861 = vadd.f32 %v188, %v793
    %v862 = vadd.f32 %v189, %v796
    %863 = vst [vmem:[#allocation2] sm:$0xff] %v799
    %864 = vst [vmem:[#allocation2 + $0x8] sm:$0xff] %v800
    %865 = vst [vmem:[#allocation2 + $0x10] sm:$0xff] %v801
    %866 = vst [vmem:[#allocation2 + $0x18] sm:$0xff] %v802
    %867 = vst [vmem:[#allocation2 + $0x20] sm:$0xff] %v803
    %868 = vst [vmem:[#allocation2 + $0x28] sm:$0xff] %v804
    %869 = vst [vmem:[#allocation2 + $0x30] sm:$0xff] %v805
    %870 = vst [vmem:[#allocation2 + $0x38] sm:$0xff] %v806
    %871 = vst [vmem:[#allocation2 + $0x40] sm:$0xff] %v807
    %872 = vst [vmem:[#allocation2 + $0x48] sm:$0xff] %v808
    %873 = vst [vmem:[#allocation2 + $0x50] sm:$0xff] %v809
    %874 = vst [vmem:[#allocation2 + $0x58] sm:$0xff] %v810
    %875 = vst [vmem:[#allocation2 + $0x60] sm:$0xff] %v811
    %876 = vst [vmem:[#allocation2 + $0x68] sm:$0xff] %v812
    %877 = vst [vmem:[#allocation2 + $0x70] sm:$0xff] %v813
    %878 = vst [vmem:[#allocation2 + $0x78] sm:$0xff] %v814
    %879 = vst [vmem:[#allocation2 + $0x80] sm:$0xff] %v815
    %880 = vst [vmem:[#allocation2 + $0x88] sm:$0xff] %v816
    %881 = vst [vmem:[#allocation2 + $0x90] sm:$0xff] %v817
    %882 = vst [vmem:[#allocation2 + $0x98] sm:$0xff] %v818
    %883 = vst [vmem:[#allocation2 + $0xa0] sm:$0xff] %v819
    %884 = vst [vmem:[#allocation2 + $0xa8] sm:$0xff] %v820
    %885 = vst [vmem:[#allocation2 + $0xb0] sm:$0xff] %v821
    %886 = vst [vmem:[#allocation2 + $0xb8] sm:$0xff] %v822
    %887 = vst [vmem:[#allocation2 + $0xc0] sm:$0xff] %v823
    %888 = vst [vmem:[#allocation2 + $0xc8] sm:$0xff] %v824
    %889 = vst [vmem:[#allocation2 + $0xd0] sm:$0xff] %v825
    %890 = vst [vmem:[#allocation2 + $0xd8] sm:$0xff] %v826
    %891 = vst [vmem:[#allocation2 + $0xe0] sm:$0xff] %v827
    %892 = vst [vmem:[#allocation2 + $0xe8] sm:$0xff] %v828
    %893 = vst [vmem:[#allocation2 + $0xf0] sm:$0xff] %v829
    %894 = vst [vmem:[#allocation2 + $0xf8] sm:$0xff] %v830
    %895 = vst [vmem:[#allocation2 + $0x100] sm:$0xff] %v831
    %896 = vst [vmem:[#allocation2 + $0x108] sm:$0xff] %v832
    %897 = vst [vmem:[#allocation2 + $0x110] sm:$0xff] %v833
    %898 = vst [vmem:[#allocation2 + $0x118] sm:$0xff] %v834
    %899 = vst [vmem:[#allocation2 + $0x120] sm:$0xff] %v835
    %900 = vst [vmem:[#allocation2 + $0x128] sm:$0xff] %v836
    %901 = vst [vmem:[#allocation2 + $0x130] sm:$0xff] %v837
    %902 = vst [vmem:[#allocation2 + $0x138] sm:$0xff] %v838
    %903 = vst [vmem:[#allocation2 + $0x140] sm:$0xff] %v839
    %904 = vst [vmem:[#allocation2 + $0x148] sm:$0xff] %v840
    %905 = vst [vmem:[#allocation2 + $0x150] sm:$0xff] %v841
    %906 = vst [vmem:[#allocation2 + $0x158] sm:$0xff] %v842
    %907 = vst [vmem:[#allocation2 + $0x160] sm:$0xff] %v843
    %908 = vst [vmem:[#allocation2 + $0x168] sm:$0xff] %v844
    %909 = vst [vmem:[#allocation2 + $0x170] sm:$0xff] %v845
    %910 = vst [vmem:[#allocation2 + $0x178] sm:$0xff] %v846
    %911 = vst [vmem:[#allocation2 + $0x180] sm:$0xff] %v847
    %912 = vst [vmem:[#allocation2 + $0x188] sm:$0xff] %v848
    %913 = vst [vmem:[#allocation2 + $0x190] sm:$0xff] %v849
    %914 = vst [vmem:[#allocation2 + $0x198] sm:$0xff] %v850
    %915 = vst [vmem:[#allocation2 + $0x1a0] sm:$0xff] %v851
    %916 = vst [vmem:[#allocation2 + $0x1a8] sm:$0xff] %v852
    %917 = vst [vmem:[#allocation2 + $0x1b0] sm:$0xff] %v853
    %918 = vst [vmem:[#allocation2 + $0x1b8] sm:$0xff] %v854
    %919 = vst [vmem:[#allocation2 + $0x1c0] sm:$0xff] %v855
    %920 = vst [vmem:[#allocation2 + $0x1c8] sm:$0xff] %v856
    %921 = vst [vmem:[#allocation2 + $0x1d0] sm:$0xff] %v857
    %922 = vst [vmem:[#allocation2 + $0x1d8] sm:$0xff] %v858
    %923 = vst [vmem:[#allocation2 + $0x1e0] sm:$0xff] %v859
    %924 = vst [vmem:[#allocation2 + $0x1e8] sm:$0xff] %v860
    %925 = vst [vmem:[#allocation2 + $0x1f0] sm:$0xff] %v861
    %926 = vst [vmem:[#allocation2 + $0x1f8] sm:$0xff] %v862
    // Predicated region
    $region34: #{tpu_custom_call.1} parent=1 // pred_check
      %p927 = pneg %p52
    $region35: #{tpu_custom_call.1} parent=1 // pred_check_branch
      %929 = sbr.rel (%p927) target = $region37
    $region36: #{tpu_custom_call.1} parent=1 // pred_region
      %v930 = vld [vmem:[#allocation2] sm:$0xff]
      %v931 = vld [vmem:[#allocation2 + $0x8] sm:$0xff]
      %v932 = vld [vmem:[#allocation2 + $0x10] sm:$0xff]
      %v933 = vld [vmem:[#allocation2 + $0x18] sm:$0xff]
      %v934 = vld [vmem:[#allocation2 + $0x20] sm:$0xff]
      %v935 = vld [vmem:[#allocation2 + $0x28] sm:$0xff]
      %v936 = vld [vmem:[#allocation2 + $0x30] sm:$0xff]
      %v937 = vld [vmem:[#allocation2 + $0x38] sm:$0xff]
      %v938 = vld [vmem:[#allocation2 + $0x40] sm:$0xff]
      %v939 = vld [vmem:[#allocation2 + $0x48] sm:$0xff]
      %v940 = vld [vmem:[#allocation2 + $0x50] sm:$0xff]
      %v941 = vld [vmem:[#allocation2 + $0x58] sm:$0xff]
      %v942 = vld [vmem:[#allocation2 + $0x60] sm:$0xff]
      %v943 = vld [vmem:[#allocation2 + $0x68] sm:$0xff]
      %v944 = vld [vmem:[#allocation2 + $0x70] sm:$0xff]
      %v945 = vld [vmem:[#allocation2 + $0x78] sm:$0xff]
      %v946 = vld [vmem:[#allocation2 + $0x80] sm:$0xff]
      %v947 = vld [vmem:[#allocation2 + $0x88] sm:$0xff]
      %v948 = vld [vmem:[#allocation2 + $0x90] sm:$0xff]
      %v949 = vld [vmem:[#allocation2 + $0x98] sm:$0xff]
      %v950 = vld [vmem:[#allocation2 + $0xa0] sm:$0xff]
      %v951 = vld [vmem:[#allocation2 + $0xa8] sm:$0xff]
      %v952 = vld [vmem:[#allocation2 + $0xb0] sm:$0xff]
      %v953 = vld [vmem:[#allocation2 + $0xb8] sm:$0xff]
      %v954 = vld [vmem:[#allocation2 + $0xc0] sm:$0xff]
      %v955 = vld [vmem:[#allocation2 + $0xc8] sm:$0xff]
      %v956 = vld [vmem:[#allocation2 + $0xd0] sm:$0xff]
      %v957 = vld [vmem:[#allocation2 + $0xd8] sm:$0xff]
      %v958 = vld [vmem:[#allocation2 + $0xe0] sm:$0xff]
      %v959 = vld [vmem:[#allocation2 + $0xe8] sm:$0xff]
      %v960 = vld [vmem:[#allocation2 + $0xf0] sm:$0xff]
      %v961 = vld [vmem:[#allocation2 + $0xf8] sm:$0xff]
      %v962 = vld [vmem:[#allocation2 + $0x100] sm:$0xff]
      %v963 = vld [vmem:[#allocation2 + $0x108] sm:$0xff]
      %v964 = vld [vmem:[#allocation2 + $0x110] sm:$0xff]
      %v965 = vld [vmem:[#allocation2 + $0x118] sm:$0xff]
      %v966 = vld [vmem:[#allocation2 + $0x120] sm:$0xff]
      %v967 = vld [vmem:[#allocation2 + $0x128] sm:$0xff]
      %v968 = vld [vmem:[#allocation2 + $0x130] sm:$0xff]
      %v969 = vld [vmem:[#allocation2 + $0x138] sm:$0xff]
      %v970 = vld [vmem:[#allocation2 + $0x140] sm:$0xff]
      %v971 = vld [vmem:[#allocation2 + $0x148] sm:$0xff]
      %v972 = vld [vmem:[#allocation2 + $0x150] sm:$0xff]
      %v973 = vld [vmem:[#allocation2 + $0x158] sm:$0xff]
      %v974 = vld [vmem:[#allocation2 + $0x160] sm:$0xff]
      %v975 = vld [vmem:[#allocation2 + $0x168] sm:$0xff]
      %v976 = vld [vmem:[#allocation2 + $0x170] sm:$0xff]
      %v977 = vld [vmem:[#allocation2 + $0x178] sm:$0xff]
      %v978 = vld [vmem:[#allocation2 + $0x180] sm:$0xff]
      %v979 = vld [vmem:[#allocation2 + $0x188] sm:$0xff]
      %v980 = vld [vmem:[#allocation2 + $0x190] sm:$0xff]
      %v981 = vld [vmem:[#allocation2 + $0x198] sm:$0xff]
      %v982 = vld [vmem:[#allocation2 + $0x1a0] sm:$0xff]
      %v983 = vld [vmem:[#allocation2 + $0x1a8] sm:$0xff]
      %v984 = vld [vmem:[#allocation2 + $0x1b0] sm:$0xff]
      %v985 = vld [vmem:[#allocation2 + $0x1b8] sm:$0xff]
      %v986 = vld [vmem:[#allocation2 + $0x1c0] sm:$0xff]
      %v987 = vld [vmem:[#allocation2 + $0x1c8] sm:$0xff]
      %v988 = vld [vmem:[#allocation2 + $0x1d0] sm:$0xff]
      %v989 = vld [vmem:[#allocation2 + $0x1d8] sm:$0xff]
      %v990 = vld [vmem:[#allocation2 + $0x1e0] sm:$0xff]
      %v991 = vld [vmem:[#allocation2 + $0x1e8] sm:$0xff]
      %v992 = vld [vmem:[#allocation2 + $0x1f0] sm:$0xff]
      %v993 = vld [vmem:[#allocation2 + $0x1f8] sm:$0xff]
      %v994 = vpack.c.bf16 %v931, %v930
      %v995 = vpack.c.bf16 %v933, %v932
      %v996 = vpack.c.bf16 %v935, %v934
      %v997 = vpack.c.bf16 %v937, %v936
      %v998 = vpack.c.bf16 %v939, %v938
      %v999 = vpack.c.bf16 %v941, %v940
      %v1000 = vpack.c.bf16 %v943, %v942
      %v1001 = vpack.c.bf16 %v945, %v944
      %v1002 = vpack.c.bf16 %v947, %v946
      %v1003 = vpack.c.bf16 %v949, %v948
      %v1004 = vpack.c.bf16 %v951, %v950
      %v1005 = vpack.c.bf16 %v953, %v952
      %v1006 = vpack.c.bf16 %v955, %v954
      %v1007 = vpack.c.bf16 %v957, %v956
      %v1008 = vpack.c.bf16 %v959, %v958
      %v1009 = vpack.c.bf16 %v961, %v960
      %v1010 = vpack.c.bf16 %v963, %v962
      %v1011 = vpack.c.bf16 %v965, %v964
      %v1012 = vpack.c.bf16 %v967, %v966
      %v1013 = vpack.c.bf16 %v969, %v968
      %v1014 = vpack.c.bf16 %v971, %v970
      %v1015 = vpack.c.bf16 %v973, %v972
      %v1016 = vpack.c.bf16 %v975, %v974
      %v1017 = vpack.c.bf16 %v977, %v976
      %v1018 = vpack.c.bf16 %v979, %v978
      %v1019 = vpack.c.bf16 %v981, %v980
      %v1020 = vpack.c.bf16 %v983, %v982
      %v1021 = vpack.c.bf16 %v985, %v984
      %v1022 = vpack.c.bf16 %v987, %v986
      %v1023 = vpack.c.bf16 %v989, %v988
      %v1024 = vpack.c.bf16 %v991, %v990
      %v1025 = vpack.c.bf16 %v993, %v992
      %v1058 = vunpack.c.l.b16 %v994
      %v1059 = vunpack.c.h.b16 %v994
      %v1060 = vunpack.c.l.b16 %v995
      %v1061 = vunpack.c.h.b16 %v995
      %v1062 = vunpack.c.l.b16 %v996
      %v1063 = vunpack.c.h.b16 %v996
      %v1064 = vunpack.c.l.b16 %v997
      %v1065 = vunpack.c.h.b16 %v997
      %v1066 = vunpack.c.l.b16 %v998
      %v1067 = vunpack.c.h.b16 %v998
      %v1068 = vunpack.c.l.b16 %v999
      %v1069 = vunpack.c.h.b16 %v999
      %v1070 = vunpack.c.l.b16 %v1000
      %v1071 = vunpack.c.h.b16 %v1000
      %v1072 = vunpack.c.l.b16 %v1001
      %v1073 = vunpack.c.h.b16 %v1001
      %v1074 = vunpack.c.l.b16 %v1002
      %v1075 = vunpack.c.h.b16 %v1002
      %v1076 = vunpack.c.l.b16 %v1003
      %v1077 = vunpack.c.h.b16 %v1003
      %v1078 = vunpack.c.l.b16 %v1004
      %v1079 = vunpack.c.h.b16 %v1004
      %v1080 = vunpack.c.l.b16 %v1005
      %v1081 = vunpack.c.h.b16 %v1005
      %v1082 = vunpack.c.l.b16 %v1006
      %v1083 = vunpack.c.h.b16 %v1006
      %v1084 = vunpack.c.l.b16 %v1007
      %v1085 = vunpack.c.h.b16 %v1007
      %v1086 = vunpack.c.l.b16 %v1008
      %v1087 = vunpack.c.h.b16 %v1008
      %v1088 = vunpack.c.l.b16 %v1009
      %v1089 = vunpack.c.h.b16 %v1009
      %v1090 = vunpack.c.l.b16 %v1010
      %v1091 = vunpack.c.h.b16 %v1010
      %v1092 = vunpack.c.l.b16 %v1011
      %v1093 = vunpack.c.h.b16 %v1011
      %v1094 = vunpack.c.l.b16 %v1012
      %v1095 = vunpack.c.h.b16 %v1012
      %v1096 = vunpack.c.l.b16 %v1013
      %v1097 = vunpack.c.h.b16 %v1013
      %v1098 = vunpack.c.l.b16 %v1014
      %v1099 = vunpack.c.h.b16 %v1014
      %v1100 = vunpack.c.l.b16 %v1015
      %v1101 = vunpack.c.h.b16 %v1015
      %v1102 = vunpack.c.l.b16 %v1016
      %v1103 = vunpack.c.h.b16 %v1016
      %v1104 = vunpack.c.l.b16 %v1017
      %v1105 = vunpack.c.h.b16 %v1017
      %v1106 = vunpack.c.l.b16 %v1018
      %v1107 = vunpack.c.h.b16 %v1018
      %v1108 = vunpack.c.l.b16 %v1019
      %v1109 = vunpack.c.h.b16 %v1019
      %v1110 = vunpack.c.l.b16 %v1020
      %v1111 = vunpack.c.h.b16 %v1020
      %v1112 = vunpack.c.l.b16 %v1021
      %v1113 = vunpack.c.h.b16 %v1021
      %v1114 = vunpack.c.l.b16 %v1022
      %v1115 = vunpack.c.h.b16 %v1022
      %v1116 = vunpack.c.l.b16 %v1023
      %v1117 = vunpack.c.h.b16 %v1023
      %v1118 = vunpack.c.l.b16 %v1024
      %v1119 = vunpack.c.h.b16 %v1024
      %v1120 = vunpack.c.l.b16 %v1025
      %v1121 = vunpack.c.h.b16 %v1025
      %v1122 = vpack.c.b16 %v1058, %v1058
      %v1123 = vpack.c.b16 %v1059, %v1059
      %v1124 = vpack.c.b16 %v1060, %v1060
      %v1125 = vpack.c.b16 %v1061, %v1061
      %v1126 = vpack.c.b16 %v1062, %v1062
      %v1127 = vpack.c.b16 %v1063, %v1063
      %v1128 = vpack.c.b16 %v1064, %v1064
      %v1129 = vpack.c.b16 %v1065, %v1065
      %v1130 = vpack.c.b16 %v1066, %v1066
      %v1131 = vpack.c.b16 %v1067, %v1067
      %v1132 = vpack.c.b16 %v1068, %v1068
      %v1133 = vpack.c.b16 %v1069, %v1069
      %v1134 = vpack.c.b16 %v1070, %v1070
      %v1135 = vpack.c.b16 %v1071, %v1071
      %v1136 = vpack.c.b16 %v1072, %v1072
      %v1137 = vpack.c.b16 %v1073, %v1073
      %v1138 = vpack.c.b16 %v1074, %v1074
      %v1139 = vpack.c.b16 %v1075, %v1075
      %v1140 = vpack.c.b16 %v1076, %v1076
      %v1141 = vpack.c.b16 %v1077, %v1077
      %v1142 = vpack.c.b16 %v1078, %v1078
      %v1143 = vpack.c.b16 %v1079, %v1079
      %v1144 = vpack.c.b16 %v1080, %v1080
      %v1145 = vpack.c.b16 %v1081, %v1081
      %v1146 = vpack.c.b16 %v1082, %v1082
      %v1147 = vpack.c.b16 %v1083, %v1083
      %v1148 = vpack.c.b16 %v1084, %v1084
      %v1149 = vpack.c.b16 %v1085, %v1085
      %v1150 = vpack.c.b16 %v1086, %v1086
      %v1151 = vpack.c.b16 %v1087, %v1087
      %v1152 = vpack.c.b16 %v1088, %v1088
      %v1153 = vpack.c.b16 %v1089, %v1089
      %v1154 = vpack.c.b16 %v1090, %v1090
      %v1155 = vpack.c.b16 %v1091, %v1091
      %v1156 = vpack.c.b16 %v1092, %v1092
      %v1157 = vpack.c.b16 %v1093, %v1093
      %v1158 = vpack.c.b16 %v1094, %v1094
      %v1159 = vpack.c.b16 %v1095, %v1095
      %v1160 = vpack.c.b16 %v1096, %v1096
      %v1161 = vpack.c.b16 %v1097, %v1097
      %v1162 = vpack.c.b16 %v1098, %v1098
      %v1163 = vpack.c.b16 %v1099, %v1099
      %v1164 = vpack.c.b16 %v1100, %v1100
      %v1165 = vpack.c.b16 %v1101, %v1101
      %v1166 = vpack.c.b16 %v1102, %v1102
      %v1167 = vpack.c.b16 %v1103, %v1103
      %v1168 = vpack.c.b16 %v1104, %v1104
      %v1169 = vpack.c.b16 %v1105, %v1105
      %v1170 = vpack.c.b16 %v1106, %v1106
      %v1171 = vpack.c.b16 %v1107, %v1107
      %v1172 = vpack.c.b16 %v1108, %v1108
      %v1173 = vpack.c.b16 %v1109, %v1109
      %v1174 = vpack.c.b16 %v1110, %v1110
      %v1175 = vpack.c.b16 %v1111, %v1111
      %v1176 = vpack.c.b16 %v1112, %v1112
      %v1177 = vpack.c.b16 %v1113, %v1113
      %v1178 = vpack.c.b16 %v1114, %v1114
      %v1179 = vpack.c.b16 %v1115, %v1115
      %v1180 = vpack.c.b16 %v1116, %v1116
      %v1181 = vpack.c.b16 %v1117, %v1117
      %v1182 = vpack.c.b16 %v1118, %v1118
      %v1183 = vpack.c.b16 %v1119, %v1119
      %v1184 = vpack.c.b16 %v1120, %v1120
      %v1185 = vpack.c.b16 %v1121, %v1121
      %1250 = vst [vmem:[#allocation8] sm:$0xf] %v1122
      %1251 = vst [vmem:[#allocation8 + $0x4] sm:$0xf] %v1123
      %1252 = vst [vmem:[#allocation8 + $0x8] sm:$0xf] %v1124
      %1253 = vst [vmem:[#allocation8 + $0xc] sm:$0xf] %v1125
      %1254 = vst [vmem:[#allocation8 + $0x10] sm:$0xf] %v1126
      %1255 = vst [vmem:[#allocation8 + $0x14] sm:$0xf] %v1127
      %1256 = vst [vmem:[#allocation8 + $0x18] sm:$0xf] %v1128
      %1257 = vst [vmem:[#allocation8 + $0x1c] sm:$0xf] %v1129
      %1258 = vst [vmem:[#allocation8 + $0x20] sm:$0xf] %v1130
      %1259 = vst [vmem:[#allocation8 + $0x24] sm:$0xf] %v1131
      %1260 = vst [vmem:[#allocation8 + $0x28] sm:$0xf] %v1132
      %1261 = vst [vmem:[#allocation8 + $0x2c] sm:$0xf] %v1133
      %1262 = vst [vmem:[#allocation8 + $0x30] sm:$0xf] %v1134
      %1263 = vst [vmem:[#allocation8 + $0x34] sm:$0xf] %v1135
      %1264 = vst [vmem:[#allocation8 + $0x38] sm:$0xf] %v1136
      %1265 = vst [vmem:[#allocation8 + $0x3c] sm:$0xf] %v1137
      %1266 = vst [vmem:[#allocation8 + $0x40] sm:$0xf] %v1138
      %1267 = vst [vmem:[#allocation8 + $0x44] sm:$0xf] %v1139
      %1268 = vst [vmem:[#allocation8 + $0x48] sm:$0xf] %v1140
      %1269 = vst [vmem:[#allocation8 + $0x4c] sm:$0xf] %v1141
      %1270 = vst [vmem:[#allocation8 + $0x50] sm:$0xf] %v1142
      %1271 = vst [vmem:[#allocation8 + $0x54] sm:$0xf] %v1143
      %1272 = vst [vmem:[#allocation8 + $0x58] sm:$0xf] %v1144
      %1273 = vst [vmem:[#allocation8 + $0x5c] sm:$0xf] %v1145
      %1274 = vst [vmem:[#allocation8 + $0x60] sm:$0xf] %v1146
      %1275 = vst [vmem:[#allocation8 + $0x64] sm:$0xf] %v1147
      %1276 = vst [vmem:[#allocation8 + $0x68] sm:$0xf] %v1148
      %1277 = vst [vmem:[#allocation8 + $0x6c] sm:$0xf] %v1149
      %1278 = vst [vmem:[#allocation8 + $0x70] sm:$0xf] %v1150
      %1279 = vst [vmem:[#allocation8 + $0x74] sm:$0xf] %v1151
      %1280 = vst [vmem:[#allocation8 + $0x78] sm:$0xf] %v1152
      %1281 = vst [vmem:[#allocation8 + $0x7c] sm:$0xf] %v1153
      %1282 = vst [vmem:[#allocation8 + $0x80] sm:$0xf] %v1154
      %1283 = vst [vmem:[#allocation8 + $0x84] sm:$0xf] %v1155
      %1284 = vst [vmem:[#allocation8 + $0x88] sm:$0xf] %v1156
      %1285 = vst [vmem:[#allocation8 + $0x8c] sm:$0xf] %v1157
      %1286 = vst [vmem:[#allocation8 + $0x90] sm:$0xf] %v1158
      %1287 = vst [vmem:[#allocation8 + $0x94] sm:$0xf] %v1159
      %1288 = vst [vmem:[#allocation8 + $0x98] sm:$0xf] %v1160
      %1289 = vst [vmem:[#allocation8 + $0x9c] sm:$0xf] %v1161
      %1290 = vst [vmem:[#allocation8 + $0xa0] sm:$0xf] %v1162
      %1291 = vst [vmem:[#allocation8 + $0xa4] sm:$0xf] %v1163
      %1292 = vst [vmem:[#allocation8 + $0xa8] sm:$0xf] %v1164
      %1293 = vst [vmem:[#allocation8 + $0xac] sm:$0xf] %v1165
      %1294 = vst [vmem:[#allocation8 + $0xb0] sm:$0xf] %v1166
      %1295 = vst [vmem:[#allocation8 + $0xb4] sm:$0xf] %v1167
      %1296 = vst [vmem:[#allocation8 + $0xb8] sm:$0xf] %v1168
      %1297 = vst [vmem:[#allocation8 + $0xbc] sm:$0xf] %v1169
      %1298 = vst [vmem:[#allocation8 + $0xc0] sm:$0xf] %v1170
      %1299 = vst [vmem:[#allocation8 + $0xc4] sm:$0xf] %v1171
      %1300 = vst [vmem:[#allocation8 + $0xc8] sm:$0xf] %v1172
      %1301 = vst [vmem:[#allocation8 + $0xcc] sm:$0xf] %v1173
      %1302 = vst [vmem:[#allocation8 + $0xd0] sm:$0xf] %v1174
      %1303 = vst [vmem:[#allocation8 + $0xd4] sm:$0xf] %v1175
      %1304 = vst [vmem:[#allocation8 + $0xd8] sm:$0xf] %v1176
      %1305 = vst [vmem:[#allocation8 + $0xdc] sm:$0xf] %v1177
      %1306 = vst [vmem:[#allocation8 + $0xe0] sm:$0xf] %v1178
      %1307 = vst [vmem:[#allocation8 + $0xe4] sm:$0xf] %v1179
      %1308 = vst [vmem:[#allocation8 + $0xe8] sm:$0xf] %v1180
      %1309 = vst [vmem:[#allocation8 + $0xec] sm:$0xf] %v1181
      %1310 = vst [vmem:[#allocation8 + $0xf0] sm:$0xf] %v1182
      %1311 = vst [vmem:[#allocation8 + $0xf4] sm:$0xf] %v1183
      %1312 = vst [vmem:[#allocation8 + $0xf8] sm:$0xf] %v1184
      %1313 = vst [vmem:[#allocation8 + $0xfc] sm:$0xf] %v1185
      %v1314 = vld [vmem:[#allocation9] sm:$0x1]
      %v1315 = vadd.f32 %v930, %v931
      %v1316 = vadd.f32 %v1315, %v932
      %v1317 = vadd.f32 %v1316, %v933
      %v1318 = vadd.f32 %v1317, %v934
      %v1319 = vadd.f32 %v1318, %v935
      %v1320 = vadd.f32 %v1319, %v936
      %v1321 = vadd.f32 %v1320, %v937
      %v1322 = vadd.f32 %v1321, %v938
      %v1323 = vadd.f32 %v1322, %v939
      %v1324 = vadd.f32 %v1323, %v940
      %v1325 = vadd.f32 %v1324, %v941
      %v1326 = vadd.f32 %v1325, %v942
      %v1327 = vadd.f32 %v1326, %v943
      %v1328 = vadd.f32 %v1327, %v944
      %v1329 = vadd.f32 %v1328, %v945
      %v1330 = vadd.f32 %v1329, %v946
      %v1331 = vadd.f32 %v1330, %v947
      %v1332 = vadd.f32 %v1331, %v948
      %v1333 = vadd.f32 %v1332, %v949
      %v1334 = vadd.f32 %v1333, %v950
      %v1335 = vadd.f32 %v1334, %v951
      %v1336 = vadd.f32 %v1335, %v952
      %v1337 = vadd.f32 %v1336, %v953
      %v1338 = vadd.f32 %v1337, %v954
      %v1339 = vadd.f32 %v1338, %v955
      %v1340 = vadd.f32 %v1339, %v956
      %v1341 = vadd.f32 %v1340, %v957
      %v1342 = vadd.f32 %v1341, %v958
      %v1343 = vadd.f32 %v1342, %v959
      %v1344 = vadd.f32 %v1343, %v960
      %v1345 = vadd.f32 %v1344, %v961
      %v1346 = vadd.f32 %v1345, %v962
      %v1347 = vadd.f32 %v1346, %v963
      %v1348 = vadd.f32 %v1347, %v964
      %v1349 = vadd.f32 %v1348, %v965
      %v1350 = vadd.f32 %v1349, %v966
      %v1351 = vadd.f32 %v1350, %v967
      %v1352 = vadd.f32 %v1351, %v968
      %v1353 = vadd.f32 %v1352, %v969
      %v1354 = vadd.f32 %v1353, %v970
      %v1355 = vadd.f32 %v1354, %v971
      %v1356 = vadd.f32 %v1355, %v972
      %v1357 = vadd.f32 %v1356, %v973
      %v1358 = vadd.f32 %v1357, %v974
      %v1359 = vadd.f32 %v1358, %v975
      %v1360 = vadd.f32 %v1359, %v976
      %v1361 = vadd.f32 %v1360, %v977
      %v1362 = vadd.f32 %v1361, %v978
      %v1363 = vadd.f32 %v1362, %v979
      %v1364 = vadd.f32 %v1363, %v980
      %v1365 = vadd.f32 %v1364, %v981
      %v1366 = vadd.f32 %v1365, %v982
      %v1367 = vadd.f32 %v1366, %v983
      %v1368 = vadd.f32 %v1367, %v984
      %v1369 = vadd.f32 %v1368, %v985
      %v1370 = vadd.f32 %v1369, %v986
      %v1371 = vadd.f32 %v1370, %v987
      %v1372 = vadd.f32 %v1371, %v988
      %v1373 = vadd.f32 %v1372, %v989
      %v1374 = vadd.f32 %v1373, %v990
      %v1375 = vadd.f32 %v1374, %v991
      %v1376 = vadd.f32 %v1375, %v992
      %v1377 = vadd.f32 %v1376, %v993
      %v1378 = vrot.slane %v1377, 4
      %v1379 = vadd.f32 %v1377, %v1378
      %v1380 = vrot.slane %v1379, 2
      %v1381 = vadd.f32 %v1379, %v1380
      %v1382 = vrot.slane %v1381, 1
      %v1383 = vadd.f32 %v1381, %v1382
      %v1384 = vadd.f32 %v1314, %v1383
      %1385 = vst [vmem:[#allocation9] sm:$0x1] %v1384
      %v1386 = vld [vmem:[#allocation11] sm:$0x1]
      %v1387 = vmul.f32 %v930, %v930
      %v1388 = vmul.f32 %v931, %v931
      %v1389 = vmul.f32 %v932, %v932
      %v1390 = vmul.f32 %v933, %v933
      %v1391 = vmul.f32 %v934, %v934
      %v1392 = vmul.f32 %v935, %v935
      %v1393 = vmul.f32 %v936, %v936
      %v1394 = vmul.f32 %v937, %v937
      %v1395 = vmul.f32 %v938, %v938
      %v1396 = vmul.f32 %v939, %v939
      %v1397 = vmul.f32 %v940, %v940
      %v1398 = vmul.f32 %v941, %v941
      %v1399 = vmul.f32 %v942, %v942
      %v1400 = vmul.f32 %v943, %v943
      %v1401 = vmul.f32 %v944, %v944
      %v1402 = vmul.f32 %v945, %v945
      %v1403 = vmul.f32 %v946, %v946
      %v1404 = vmul.f32 %v947, %v947
      %v1405 = vmul.f32 %v948, %v948
      %v1406 = vmul.f32 %v949, %v949
      %v1407 = vmul.f32 %v950, %v950
      %v1408 = vmul.f32 %v951, %v951
      %v1409 = vmul.f32 %v952, %v952
      %v1410 = vmul.f32 %v953, %v953
      %v1411 = vmul.f32 %v954, %v954
      %v1412 = vmul.f32 %v955, %v955
      %v1413 = vmul.f32 %v956, %v956
      %v1414 = vmul.f32 %v957, %v957
      %v1415 = vmul.f32 %v958, %v958
      %v1416 = vmul.f32 %v959, %v959
      %v1417 = vmul.f32 %v960, %v960
      %v1418 = vmul.f32 %v961, %v961
      %v1419 = vmul.f32 %v962, %v962
      %v1420 = vmul.f32 %v963, %v963
      %v1421 = vmul.f32 %v964, %v964
      %v1422 = vmul.f32 %v965, %v965
      %v1423 = vmul.f32 %v966, %v966
      %v1424 = vmul.f32 %v967, %v967
      %v1425 = vmul.f32 %v968, %v968
      %v1426 = vmul.f32 %v969, %v969
      %v1427 = vmul.f32 %v970, %v970
      %v1428 = vmul.f32 %v971, %v971
      %v1429 = vmul.f32 %v972, %v972
      %v1430 = vmul.f32 %v973, %v973
      %v1431 = vmul.f32 %v974, %v974
      %v1432 = vmul.f32 %v975, %v975
      %v1433 = vmul.f32 %v976, %v976
      %v1434 = vmul.f32 %v977, %v977
      %v1435 = vmul.f32 %v978, %v978
      %v1436 = vmul.f32 %v979, %v979
      %v1437 = vmul.f32 %v980, %v980
      %v1438 = vmul.f32 %v981, %v981
      %v1439 = vmul.f32 %v982, %v982
      %v1440 = vmul.f32 %v983, %v983
      %v1441 = vmul.f32 %v984, %v984
      %v1442 = vmul.f32 %v985, %v985
      %v1443 = vmul.f32 %v986, %v986
      %v1444 = vmul.f32 %v987, %v987
      %v1445 = vmul.f32 %v988, %v988
      %v1446 = vmul.f32 %v989, %v989
      %v1447 = vmul.f32 %v990, %v990
      %v1448 = vmul.f32 %v991, %v991
      %v1449 = vmul.f32 %v992, %v992
      %v1450 = vmul.f32 %v993, %v993
      %v1451 = vadd.f32 %v1387, %v1388
      %v1452 = vadd.f32 %v1451, %v1389
      %v1453 = vadd.f32 %v1452, %v1390
      %v1454 = vadd.f32 %v1453, %v1391
      %v1455 = vadd.f32 %v1454, %v1392
      %v1456 = vadd.f32 %v1455, %v1393
      %v1457 = vadd.f32 %v1456, %v1394
      %v1458 = vadd.f32 %v1457, %v1395
      %v1459 = vadd.f32 %v1458, %v1396
      %v1460 = vadd.f32 %v1459, %v1397
      %v1461 = vadd.f32 %v1460, %v1398
      %v1462 = vadd.f32 %v1461, %v1399
      %v1463 = vadd.f32 %v1462, %v1400
      %v1464 = vadd.f32 %v1463, %v1401
      %v1465 = vadd.f32 %v1464, %v1402
      %v1466 = vadd.f32 %v1465, %v1403
      %v1467 = vadd.f32 %v1466, %v1404
      %v1468 = vadd.f32 %v1467, %v1405
      %v1469 = vadd.f32 %v1468, %v1406
      %v1470 = vadd.f32 %v1469, %v1407
      %v1471 = vadd.f32 %v1470, %v1408
      %v1472 = vadd.f32 %v1471, %v1409
      %v1473 = vadd.f32 %v1472, %v1410
      %v1474 = vadd.f32 %v1473, %v1411
      %v1475 = vadd.f32 %v1474, %v1412
      %v1476 = vadd.f32 %v1475, %v1413
      %v1477 = vadd.f32 %v1476, %v1414
      %v1478 = vadd.f32 %v1477, %v1415
      %v1479 = vadd.f32 %v1478, %v1416
      %v1480 = vadd.f32 %v1479, %v1417
      %v1481 = vadd.f32 %v1480, %v1418
      %v1482 = vadd.f32 %v1481, %v1419
      %v1483 = vadd.f32 %v1482, %v1420
      %v1484 = vadd.f32 %v1483, %v1421
      %v1485 = vadd.f32 %v1484, %v1422
      %v1486 = vadd.f32 %v1485, %v1423
      %v1487 = vadd.f32 %v1486, %v1424
      %v1488 = vadd.f32 %v1487, %v1425
      %v1489 = vadd.f32 %v1488, %v1426
      %v1490 = vadd.f32 %v1489, %v1427
      %v1491 = vadd.f32 %v1490, %v1428
      %v1492 = vadd.f32 %v1491, %v1429
      %v1493 = vadd.f32 %v1492, %v1430
      %v1494 = vadd.f32 %v1493, %v1431
      %v1495 = vadd.f32 %v1494, %v1432
      %v1496 = vadd.f32 %v1495, %v1433
      %v1497 = vadd.f32 %v1496, %v1434
      %v1498 = vadd.f32 %v1497, %v1435
      %v1499 = vadd.f32 %v1498, %v1436
      %v1500 = vadd.f32 %v1499, %v1437
      %v1501 = vadd.f32 %v1500, %v1438
      %v1502 = vadd.f32 %v1501, %v1439
      %v1503 = vadd.f32 %v1502, %v1440
      %v1504 = vadd.f32 %v1503, %v1441
      %v1505 = vadd.f32 %v1504, %v1442
      %v1506 = vadd.f32 %v1505, %v1443
      %v1507 = vadd.f32 %v1506, %v1444
      %v1508 = vadd.f32 %v1507, %v1445
      %v1509 = vadd.f32 %v1508, %v1446
      %v1510 = vadd.f32 %v1509, %v1447
      %v1511 = vadd.f32 %v1510, %v1448
      %v1512 = vadd.f32 %v1511, %v1449
      %v1513 = vadd.f32 %v1512, %v1450
      %v1514 = vrot.slane %v1513, 4
      %v1515 = vadd.f32 %v1513, %v1514
      %v1516 = vrot.slane %v1515, 2
      %v1517 = vadd.f32 %v1515, %v1516
      %v1518 = vrot.slane %v1517, 1
      %v1519 = vadd.f32 %v1517, %v1518
      %v1520 = vadd.f32 %v1386, %v1519
      %1521 = vst [vmem:[#allocation11] sm:$0x1] %v1520
    $region37: #{tpu_custom_call.1} parent=1 // pred_fallthru
      _
    // Predicated region
    $region38: #{tpu_custom_call.1} parent=1 // pred_check
      _
    $region39: #{tpu_custom_call.1} parent=1 // pred_check_branch
      %1523 = sbr.rel (%p53) target = $region41
    $region40: #{tpu_custom_call.1} parent=1 // pred_region
      %v1524 = vld [vmem:[#allocation9] sm:$0x1]
      %v1525 = vmul.f32 %v1524, 0.001953125
      %v1526 = vld [vmem:[#allocation11] sm:$0x1]
      %v1527 = vmul.f32 %v1526, 0.001953125
      %v1528 = vmul.f32 %v1525, %v1525
      %v1529 = vsub.f32 %v1527, %v1528
      %v1530 = vmax.f32 %v1529, 0.0
      %v1531 = vadd.f32 %v1530, 1e-05
      %v1532 = vrsqrt.pop %v1531
      %v1533 = vld [vmem:[%s2] sm:$0x1]
      %v1534 = vmul.f32 %v1532, %v1533
      %v1535 = vld [vmem:[%s3] sm:$0x1]
      %v1536 = vmul.f32 %v1525, %v1534
      %v1537 = vsub.f32 %v1535, %v1536
      %1538 = vst [vmem:[#allocation9] sm:$0x1] %v1534
      %1539 = vst [vmem:[#allocation11] sm:$0x1] %v1537
    $region41: #{tpu_custom_call.1} parent=1 // pred_fallthru
      _
    // Predicated region
    $region42: #{tpu_custom_call.1} parent=1 // pred_check
      _
    $region43: #{tpu_custom_call.1} parent=1 // pred_check_branch
      %1541 = sbr.rel (0) target = $region45
    $region44: #{tpu_custom_call.1} parent=1 // pred_region
      %s1543 = ssub.s32 4096, 4096
      %1544 = vsyncadd [#allocation5], %s1543
      %s1545 = sshll.u32 [#allocation8], 4
      %s1546 = int_to_ptr.vmem [resolvable:$true] %s1545
      %1551 = dma.vmem_to_hbm [thread:$0]  %s1546, 4096, %s4, [#allocation5], 64, 64, 4
    $region45: #{tpu_custom_call.1} parent=1 // pred_fallthru
      _
    // Predicated region
    $region46: #{tpu_custom_call.1} parent=1 // pred_check
      _
    $region47: #{tpu_custom_call.1} parent=1 // pred_check_branch
      %1553 = sbr.rel (0) target = $region49
    $region48: #{tpu_custom_call.1} parent=1 // pred_region
      %s1555 = ssub.s32 16, 16
      %1556 = vsyncadd [#allocation10], %s1555
      %s1558 = sshll.u32 [#allocation9], 4
      %s1559 = int_to_ptr.vmem [resolvable:$true] %s1558
      %1561 = dma.vmem_to_hbm [thread:$0]  %s1559, 16, %s5, [#allocation10]
    $region49: #{tpu_custom_call.1} parent=1 // pred_fallthru
      _
    // Predicated region
    $region50: #{tpu_custom_call.1} parent=1 // pred_check
      _
    $region51: #{tpu_custom_call.1} parent=1 // pred_check_branch
      %1563 = sbr.rel (0) target = $region53
    $region52: #{tpu_custom_call.1} parent=1 // pred_region
      %s1565 = ssub.s32 16, 16
      %1566 = vsyncadd [#allocation10], %s1565
      %s1568 = sshll.u32 [#allocation11], 4
      %s1569 = int_to_ptr.vmem [resolvable:$true] %s1568
      %1571 = dma.vmem_to_hbm [thread:$0]  %s1569, 16, %s6, [#allocation10]
    $region53: #{tpu_custom_call.1} parent=1 // pred_fallthru
      _
    // Predicated region
    $region54: #{tpu_custom_call.1} parent=1 // pred_check
      _
    $region55: #{tpu_custom_call.1} parent=1 // pred_check_branch
      %1573 = sbr.rel (0) target = $region57
    $region56: #{tpu_custom_call.1} parent=1 // pred_region
      %1574 = dma.done [#allocation5], 4096
    $region57: #{tpu_custom_call.1} parent=1 // pred_fallthru
      _
    // Predicated region
    $region58: #{tpu_custom_call.1} parent=1 // pred_check
      _
    $region59: #{tpu_custom_call.1} parent=1 // pred_check_branch
      %1576 = sbr.rel (0) target = $region61
    $region60: #{tpu_custom_call.1} parent=1 // pred_region
      %1577 = dma.done [#allocation10], 16
    $region61: #{tpu_custom_call.1} parent=1 // pred_fallthru
      _
    // Predicated region
    $region62: #{tpu_custom_call.1} parent=1 // pred_check
      _
    $region63: #{tpu_custom_call.1} parent=1 // pred_check_branch
      %1579 = sbr.rel (0) target = $region65
    $region64: #{tpu_custom_call.1} parent=1 // pred_region
      %1580 = dma.done [#allocation10], 16
    $region65: #{tpu_custom_call.1} parent=1 // pred_fallthru
      _
    %1581 = vsyncpa [#allocation4], 1
    %1582 = vsyncpa [#allocation7], 1
    %1583 = vsyncpa [#allocation5], 1
    %1584 = vsyncpa [#allocation10], 1

</llo_original>
